<compile_context>
chip_gen: v7x
topology: tpu7x:2x2x1
jax: 0.10.0
libtpu: 0.0.40
codegen_flags: <defaults>
</compile_context>

<pallas_src>
import jax
import jax.numpy as jnp
from jax import lax
from jax.experimental import pallas as pl
from jax.experimental.pallas import tpu as pltpu

EPS = 1e-5
_LANE = 128


def _pick_tile(s1, bytes_per_spatial_elem, vmem_block_budget, tile_max=None):
    """Largest multiple-of-128 divisor of s1 whose double-buffered blocks fit."""
    cap = vmem_block_budget // max(int(bytes_per_spatial_elem), 1)
    if tile_max is not None:
        cap = min(cap, tile_max)
    if s1 <= cap:
        return s1
    t = (min(cap, s1) // _LANE) * _LANE
    while t >= _LANE:
        if s1 % t == 0:
            return t
        t -= _LANE
    # TODO(synk): ragged spatial sizes (no multiple-of-128 divisor under the
    # VMEM cap) fall back to a full-extent untiled block.
    return s1


def _stats_kernel(up_ref, x_ref, w_up_ref, b_up_ref, w_x_ref, b_x_ref, st_ref):
    """Pass 1: conv + bias + ReLU; accumulate per-packed-channel sum / sum-sq
    across the spatial-tile grid axis in the resident output block."""
    c_up = w_up_ref.shape[0]
    c_pack = st_ref.shape[1]

    @pl.when(pl.program_id(1) == 0)
    def _():
        st_ref[...] = jnp.zeros_like(st_ref)

    # packed transposed conv: (4*up_out, up_in) @ (up_in, T)
    y_up = jnp.dot(w_up_ref[...], up_ref[0], preferred_element_type=jnp.float32)
    y_up = jnp.maximum(y_up + b_up_ref[...], 0.0)
    # 1x1 conv: (x_out, x_in) @ (x_in, 4T)
    y_x = jnp.dot(w_x_ref[...], x_ref[0], preferred_element_type=jnp.float32)
    y_x = jnp.maximum(y_x + b_x_ref[...], 0.0)

    # Per-row (packed channel) reductions over the lane (spatial) axis; the
    # kh/kw group fold happens in the tiny JAX combine (keeps the kernel free
    # of sub-8-sublane slicing).
    st_ref[0, 0:c_up, 0:1] += jnp.sum(y_up, axis=1, keepdims=True)
    st_ref[0, 0:c_up, 1:2] += jnp.sum(y_up * y_up, axis=1, keepdims=True)
    st_ref[0, c_up:c_pack, 0:1] += jnp.sum(y_x, axis=1, keepdims=True)
    st_ref[0, c_up:c_pack, 1:2] += jnp.sum(y_x * y_x, axis=1, keepdims=True)


def _write_kernel(up_ref, x_ref, w_up_ref, p_up_ref, w_x_ref, p_x_ref,
                  oup_ref, ox_ref):
    """Pass 2: recompute conv + bias + ReLU, apply folded BN scale/shift.

    The x-half lands directly in the final (N, n_out, S2) buffer (channel
    block chosen by the out_spec); the packed up-half is one full-height,
    lane-dense store."""
    y_up = jnp.dot(w_up_ref[...], up_ref[0], preferred_element_type=jnp.float32)
    y_up = jnp.maximum(y_up + p_up_ref[:, 0:1], 0.0)
    oup_ref[0] = y_up * p_up_ref[:, 1:2] + p_up_ref[:, 2:3]

    y_x = jnp.dot(w_x_ref[...], x_ref[0], preferred_element_type=jnp.float32)
    y_x = jnp.maximum(y_x + p_x_ref[:, 0:1], 0.0)
    ox_ref[0] = y_x * p_x_ref[:, 1:2] + p_x_ref[:, 2:3]


def unet_block_forward(up_p, x_p, params, *, tile_max=None,
                       vmem_block_budget=24 * 1024 * 1024):
    """up_p: (N, up_in, H, W), x_p: (N, x_in, 2H, 2W) -> (N, n_out, 2H, 2W)."""
    w_tr, b_tr = params["w_tr"], params["b_tr"]
    w_x, b_x = params["w_x"], params["b_x"]
    gamma, beta = params["gamma"], params["beta"]

    N, up_in, H, W = up_p.shape
    _, x_in, H2, W2 = x_p.shape
    assert H2 == 2 * H and W2 == 2 * W
    up_out = w_tr.shape[1]
    x_out = w_x.shape[0]
    n_out = up_out + x_out
    c_up = 4 * up_out                  # packed (kh, kw, c) rows
    c_pack = c_up + x_out
    S1 = H * W
    S2 = H2 * W2                       # = 4 * S1
    f32 = jnp.float32

    # Per-step VMEM of the double-buffered pass-2 blocks, per spatial element:
    #   in: up (up_in, T), x (x_in, 4T); out: packed-up (4up_out, T), x (x_out, 4T)
    bytes_per_t = 2 * 4 * (up_in + 4 * x_in + 4 * up_out + 4 * x_out)
    T = _pick_tile(S1, bytes_per_t, vmem_block_budget, tile_max)
    n_t = S1 // T

    up3 = up_p.reshape(N, up_in, S1)   # free reshapes (stay channel-major)
    x3 = x_p.reshape(N, x_in, S2)

    # ConvTranspose2d weight (up_in, up_out, 2, 2) -> packed rows (kh, kw, c).
    w_up = w_tr.transpose(2, 3, 1, 0).reshape(c_up, up_in).astype(f32)
    b_up_col = jnp.tile(b_tr.astype(f32), 4).reshape(c_up, 1)
    # Conv2d 1x1 weight (x_out, x_in, 1, 1) -> (x_out, x_in).
    w_x2 = w_x[:, :, 0, 0].astype(f32)
    b_x_col = b_x.astype(f32).reshape(x_out, 1)

    wt_bytes = 4 * 2 * (c_up * (up_in + 4) + x_out * (x_in + 4))
    vmem_limit = int(min(96 << 20,
                         max(32 << 20, bytes_per_t * T + wt_bytes + (8 << 20))))

    # TODO(synk): with N == 1 pass 1 has only 1-way parallel coverage on v7x
    # (spatial axis is "arbitrary" for the resident stats accumulator).
    cp_stats = pltpu.CompilerParams(
        dimension_semantics=("parallel", "arbitrary"),
        vmem_limit_bytes=vmem_limit)
    cp_write = pltpu.CompilerParams(
        dimension_semantics=("parallel", "parallel"),
        vmem_limit_bytes=vmem_limit)

    conv_flops = 2 * N * S1 * c_up * up_in + 2 * N * S2 * x_out * x_in
    in_bytes = 4 * N * (up_in * S1 + x_in * S2)
    out_bytes = 4 * N * (c_up * S1 + x_out * S2)

    # ---- pass 1: per-batch per-channel sum / sum-sq (no intermediate in HBM) --
    stats = pl.pallas_call(
        _stats_kernel,
        out_shape=jax.ShapeDtypeStruct((N, c_pack, 2), f32),
        grid=(N, n_t),
        in_specs=[
            pl.BlockSpec((1, up_in, T), lambda n, m: (n, 0, m)),
            pl.BlockSpec((1, x_in, 4 * T), lambda n, m: (n, 0, m)),
            pl.BlockSpec((c_up, up_in), lambda n, m: (0, 0)),
            pl.BlockSpec((c_up, 1), lambda n, m: (0, 0)),
            pl.BlockSpec((x_out, x_in), lambda n, m: (0, 0)),
            pl.BlockSpec((x_out, 1), lambda n, m: (0, 0)),
        ],
        out_specs=pl.BlockSpec((1, c_pack, 2), lambda n, m: (n, 0, 0)),
        compiler_params=cp_stats,
        cost_estimate=pl.CostEstimate(flops=conv_flops, transcendentals=0,
                                      bytes_accessed=in_bytes),
    )(up3, x3, w_up, b_up_col, w_x2, b_x_col)

    # ---- tiny combine: fold kh/kw groups, merge per-batch moments (Chan),
    # ---- fold BN into per-channel scale/shift ----
    count = jnp.float32(S2)                           # elems per (n, channel)
    s_pack, q_pack = stats[..., 0], stats[..., 1]     # (N, c_pack)
    s_cat = jnp.concatenate(
        [s_pack[:, :c_up].reshape(N, 4, up_out).sum(axis=1), s_pack[:, c_up:]],
        axis=1)                                       # (N, n_out)
    q_cat = jnp.concatenate(
        [q_pack[:, :c_up].reshape(N, 4, up_out).sum(axis=1), q_pack[:, c_up:]],
        axis=1)
    mean_n = s_cat / count
    m2_n = q_cat - s_cat * mean_n                     # per-batch Sum(x-mean_n)^2
    mean = jnp.mean(mean_n, axis=0)                   # (n_out,)
    m2 = jnp.sum(m2_n, axis=0) + count * jnp.sum((mean_n - mean) ** 2, axis=0)
    # TODO(synk): a fully shifted/Welford in-kernel accumulation would further
    # harden the variance for extreme N*H*W; clamp handles mild cancellation.
    var = jnp.maximum(m2 / (N * count), 0.0)          # biased (training-mode BN)
    scale = gamma.astype(f32) * lax.rsqrt(var + EPS)
    shift = beta.astype(f32) - mean * scale

    p_up = jnp.stack([jnp.tile(b_tr.astype(f32), 4),
                      jnp.tile(scale[:up_out], 4),
                      jnp.tile(shift[:up_out], 4)], axis=1)    # (c_up, 3)
    p_x = jnp.stack([b_x.astype(f32), scale[up_out:], shift[up_out:]],
                    axis=1)                                    # (x_out, 3)

    # ---- pass 2: recompute conv + ReLU, apply folded BN, write outputs ----
    # x-half goes straight into the final (N, n_out, S2) buffer (channel block
    # 1 == offset up_out) when the channel count is sublane-aligned.
    fuse_x = (x_out % 8 == 0) and (up_out == x_out)
    fin_shape = (N, n_out, S2) if fuse_x else (N, x_out, S2)
    fin_cblk = 1 if fuse_x else 0

    oup, ofin = pl.pallas_call(
        _write_kernel,
        out_shape=(jax.ShapeDtypeStruct((N, c_up, S1), f32),
                   jax.ShapeDtypeStruct(fin_shape, f32)),
        grid=(N, n_t),
        in_specs=[
            pl.BlockSpec((1, up_in, T), lambda n, m: (n, 0, m)),
            pl.BlockSpec((1, x_in, 4 * T), lambda n, m: (n, 0, m)),
            pl.BlockSpec((c_up, up_in), lambda n, m: (0, 0)),
            pl.BlockSpec((c_up, 3), lambda n, m: (0, 0)),
            pl.BlockSpec((x_out, x_in), lambda n, m: (0, 0)),
            pl.BlockSpec((x_out, 3), lambda n, m: (0, 0)),
        ],
        out_specs=[
            pl.BlockSpec((1, c_up, T), lambda n, m: (n, 0, m)),
            pl.BlockSpec((1, x_out, 4 * T), lambda n, m: (n, fin_cblk, m)),
        ],
        compiler_params=cp_write,
        cost_estimate=pl.CostEstimate(flops=conv_flops, transcendentals=0,
                                      bytes_accessed=in_bytes + out_bytes),
    )(up3, x3, w_up, p_up, w_x2, p_x)

    # ---- assembly: 2x2 pixel-shuffle de-interleave of the up-half only ----
    # TODO(synk): fusing the stride-2 lane interleave into the kernel store
    # would remove this last XLA pass over the up-half.
    up_img = (oup.reshape(N, 2, 2, up_out, H, W)
              .transpose(0, 3, 4, 1, 5, 2)          # (N, up_out, H, 2, W, 2)
              .reshape(N, up_out, S2))
    if fuse_x:
        out = ofin.at[:, :up_out, :].set(up_img)    # in-place DUS of up-half
    else:
        # TODO(synk): non-8-aligned x_out keeps the concat fallback.
        out = jnp.concatenate([up_img, ofin], axis=1)
    return out.reshape(N, n_out, 2 * H, 2 * W)


def reference_forward(up_p, x_p, params):
    """Pure-JAX reference mirroring PyTorch semantics (training-mode BN)."""
    w_tr, b_tr, w_x, b_x, gamma, beta = (
        params["w_tr"], params["b_tr"], params["w_x"], params["b_x"],
        params["gamma"], params["beta"])
    N, _, H, W = up_p.shape
    up_out = w_tr.shape[1]
    # ConvTranspose2d, kernel=2, stride=2
    t = jnp.einsum('nchw,cokl->nohwkl', up_p, w_tr, precision='highest')
    t = (t.transpose(0, 1, 2, 4, 3, 5).reshape(N, up_out, 2 * H, 2 * W)
         + b_tr[None, :, None, None])
    # Conv2d 1x1
    xo = (jnp.einsum('nchw,oc->nohw', x_p, w_x[:, :, 0, 0], precision='highest')
          + b_x[None, :, None, None])
    cat = jnp.concatenate([t, xo], axis=1)
    r = jnp.maximum(cat, 0.0)
    mean = r.mean(axis=(0, 2, 3), keepdims=True)
    var = r.var(axis=(0, 2, 3), keepdims=True)  # biased, as in BN training mode
    return ((r - mean) * lax.rsqrt(var + EPS)
            * gamma[None, :, None, None] + beta[None, :, None, None])


if __name__ == "__main__":
    # UnetBlock(up_in=8, x_in=8, n_out=16) -> up_out = x_out = 8 (8-aligned
    # channels so the x-half stores straight into the final buffer).
    N, up_in, x_in, n_out = 2, 8, 8, 16
    up_out = x_out = n_out // 2
    H = W = 16                       # x_p spatial is 2H x 2W = 32 x 32

    key = jax.random.PRNGKey(0)
    k1, k2, k3, k4, k5, k6, k7, k8 = jax.random.split(key, 8)
    up_p = jax.random.normal(k1, (N, up_in, H, W), jnp.float32)
    x_p = jax.random.normal(k2, (N, x_in, 2 * H, 2 * W), jnp.float32)

    params = {
        # ConvTranspose2d weight: (in_channels, out_channels, kH, kW)
        "w_tr": 0.2 * jax.random.normal(k3, (up_in, up_out, 2, 2), jnp.float32),
        "b_tr": 0.1 * jax.random.normal(k4, (up_out,), jnp.float32),
        # Conv2d 1x1 weight: (out_channels, in_channels, 1, 1)
        "w_x": 0.2 * jax.random.normal(k5, (x_out, x_in, 1, 1), jnp.float32),
        "b_x": 0.1 * jax.random.normal(k6, (x_out,), jnp.float32),
        # BatchNorm affine params
        "gamma": 1.0 + 0.1 * jax.random.normal(k7, (n_out,), jnp.float32),
        "beta": 0.1 * jax.random.normal(k8, (n_out,), jnp.float32),
    }

    ref = reference_forward(up_p, x_p, params)

    # tile_max=128 splits S1=256 into 2 spatial tiles (exercises the resident
    # stats accumulator and the pipelined multi-tile path at toy sizes).
    fwd_tiled = jax.jit(lambda a, b, p: unet_block_forward(a, b, p,
                                                           tile_max=128))
    out_tiled = jax.block_until_ready(fwd_tiled(up_p, x_p, params))
    assert out_tiled.shape == (N, n_out, 2 * H, 2 * W), out_tiled.shape
    assert jnp.allclose(out_tiled, ref, rtol=1e-3, atol=1e-3), (
        float(jnp.max(jnp.abs(out_tiled - ref))))

    # Default (VMEM-budgeted) tiling: full-extent single tile at these sizes.
    fwd = jax.jit(lambda a, b, p: unet_block_forward(a, b, p))
    out = jax.block_until_ready(fwd(up_p, x_p, params))
    assert jnp.allclose(out, ref, rtol=1e-3, atol=1e-3), (
        float(jnp.max(jnp.abs(out - ref))))

    print("KERNEL_OK")
</pallas_src>

<mosaic_0001>
module attributes {stable_mosaic.version = 11 : i64} {
  func.func @_stats_kernel(%arg0: i32, %arg1: i32, %arg2: memref<1x8x128xf32, #tpu.memory_space<vmem>>, %arg3: memref<1x8x512xf32, #tpu.memory_space<vmem>>, %arg4: memref<32x8xf32, #tpu.memory_space<vmem>>, %arg5: memref<32x1xf32, #tpu.memory_space<vmem>>, %arg6: memref<8x8xf32, #tpu.memory_space<vmem>>, %arg7: memref<8x1xf32, #tpu.memory_space<vmem>>, %arg8: memref<1x40x2xf32, #tpu.memory_space<vmem>>) attributes {dimension_semantics = [#tpu.dimension_semantics<parallel>, #tpu.dimension_semantics<arbitrary>], iteration_bounds = array<i64: 2, 2>, scalar_prefetch = 0 : i64, scratch_operands = 0 : i64, tpu.core_type = #tpu.core_type<tc>, window_params = [{transform_indices = @transform_0, window_bounds = array<i64: 1, 8, 128>}, {transform_indices = @transform_1, window_bounds = array<i64: 1, 8, 512>}, {pipeline_mode = #tpu.pipeline_mode<synchronous>, transform_indices = @transform_2, window_bounds = array<i64: 32, 8>}, {pipeline_mode = #tpu.pipeline_mode<synchronous>, transform_indices = @transform_3, window_bounds = array<i64: 32, 1>}, {pipeline_mode = #tpu.pipeline_mode<synchronous>, transform_indices = @transform_4, window_bounds = array<i64: 8, 8>}, {pipeline_mode = #tpu.pipeline_mode<synchronous>, transform_indices = @transform_5, window_bounds = array<i64: 8, 1>}, {transform_indices = @transform_6, window_bounds = array<i64: 1, 40, 2>}]} {
    %c0_i32 = arith.constant 0 : i32
    %0 = arith.cmpi eq, %arg1, %c0_i32 : i32
    %1 = arith.extui %0 : i1 to i32
    %c0_i32_0 = arith.constant 0 : i32
    %2 = arith.cmpi ne, %1, %c0_i32_0 : i32
    scf.if %2 {
      %cst_43 = arith.constant 0.000000e+00 : f32
      %55 = vector.broadcast %cst_43 : f32 to vector<1x40x2xf32>
      %c0_44 = arith.constant 0 : index
      %c0_45 = arith.constant 0 : index
      %c0_46 = arith.constant 0 : index
      %56 = vector.load %arg8[%c0_44, %c0_45, %c0_46] : memref<1x40x2xf32, #tpu.memory_space<vmem>>, vector<1x40x2xf32>
      tpu.vector_store %arg8[%c0_44, %c0_45, %c0_46], %55 {strides = array<i32>} : memref<1x40x2xf32, #tpu.memory_space<vmem>>, vector<1x40x2xf32>,
    } else {
    }
    %c0 = arith.constant 0 : index
    %c0_1 = arith.constant 0 : index
    %3 = vector.load %arg4[%c0, %c0_1] : memref<32x8xf32, #tpu.memory_space<vmem>>, vector<32x8xf32>
    %c0_2 = arith.constant 0 : index
    %c0_3 = arith.constant 0 : index
    %c0_4 = arith.constant 0 : index
    %4 = vector.load %arg2[%c0_2, %c0_3, %c0_4] : memref<1x8x128xf32, #tpu.memory_space<vmem>>, vector<1x8x128xf32>
    %5 = vector.shape_cast %4 : vector<1x8x128xf32> to vector<8x128xf32>
    %cst = arith.constant dense<0.000000e+00> : vector<32x128xf32>
    %6 = tpu.matmul %3, %5, %cst {dimension_numbers = #tpu.dot_dimension_numbers<[1], [0], [0], [1], [0, 0, 1, 1], [], []>} : vector<32x8xf32>, vector<8x128xf32>, vector<32x128xf32> -> vector<32x128xf32>
    %c0_5 = arith.constant 0 : index
    %c0_6 = arith.constant 0 : index
    %7 = vector.load %arg5[%c0_5, %c0_6] : memref<32x1xf32, #tpu.memory_space<vmem>>, vector<32x1xf32>
    %8 = vector.broadcast %7 : vector<32x1xf32> to vector<32x128xf32>
    %9 = arith.addf %6, %8 : vector<32x128xf32>
    %cst_7 = arith.constant 0.000000e+00 : f32
    %10 = vector.broadcast %cst_7 : f32 to vector<32x128xf32>
    %11 = arith.maximumf %9, %10 : vector<32x128xf32>
    %c0_8 = arith.constant 0 : index
    %c0_9 = arith.constant 0 : index
    %12 = vector.load %arg6[%c0_8, %c0_9] : memref<8x8xf32, #tpu.memory_space<vmem>>, vector<8x8xf32>
    %c0_10 = arith.constant 0 : index
    %c0_11 = arith.constant 0 : index
    %c0_12 = arith.constant 0 : index
    %13 = vector.load %arg3[%c0_10, %c0_11, %c0_12] : memref<1x8x512xf32, #tpu.memory_space<vmem>>, vector<1x8x512xf32>
    %14 = vector.shape_cast %13 : vector<1x8x512xf32> to vector<8x512xf32>
    %cst_13 = arith.constant dense<0.000000e+00> : vector<8x512xf32>
    %15 = tpu.matmul %12, %14, %cst_13 {dimension_numbers = #tpu.dot_dimension_numbers<[1], [0], [0], [1], [0, 0, 1, 1], [], []>} : vector<8x8xf32>, vector<8x512xf32>, vector<8x512xf32> -> vector<8x512xf32>
    %c0_14 = arith.constant 0 : index
    %c0_15 = arith.constant 0 : index
    %16 = vector.load %arg7[%c0_14, %c0_15] : memref<8x1xf32, #tpu.memory_space<vmem>>, vector<8x1xf32>
    %17 = vector.broadcast %16 : vector<8x1xf32> to vector<8x512xf32>
    %18 = arith.addf %15, %17 : vector<8x512xf32>
    %cst_16 = arith.constant 0.000000e+00 : f32
    %19 = vector.broadcast %cst_16 : f32 to vector<8x512xf32>
    %20 = arith.maximumf %18, %19 : vector<8x512xf32>
    %c0_17 = arith.constant 0 : index
    %c0_18 = arith.constant 0 : index
    %c0_19 = arith.constant 0 : index
    %21 = vector.load %arg8[%c0_17, %c0_18, %c0_19] : memref<1x40x2xf32, #tpu.memory_space<vmem>>, vector<1x32x1xf32>
    %22 = vector.shape_cast %21 : vector<1x32x1xf32> to vector<32x1xf32>
    %cst_20 = arith.constant dense<0.000000e+00> : vector<32xf32>
    %23 = vector.multi_reduction <add>, %11, %cst_20 [1] : vector<32x128xf32> to vector<32xf32>
    %24 = vector.shape_cast %23 : vector<32xf32> to vector<32x1xf32>
    %25 = arith.addf %22, %24 : vector<32x1xf32>
    %c0_21 = arith.constant 0 : index
    %c0_22 = arith.constant 0 : index
    %c0_23 = arith.constant 0 : index
    %26 = vector.load %arg8[%c0_21, %c0_22, %c0_23] : memref<1x40x2xf32, #tpu.memory_space<vmem>>, vector<1x32x1xf32>
    %27 = vector.shape_cast %26 : vector<1x32x1xf32> to vector<32x1xf32>
    %28 = vector.shape_cast %25 : vector<32x1xf32> to vector<1x32x1xf32>
    tpu.vector_store %arg8[%c0_21, %c0_22, %c0_23], %28 {strides = array<i32>} : memref<1x40x2xf32, #tpu.memory_space<vmem>>, vector<1x32x1xf32>,
    %c0_24 = arith.constant 0 : index
    %c0_25 = arith.constant 0 : index
    %c1 = arith.constant 1 : index
    %29 = vector.load %arg8[%c0_24, %c0_25, %c1] : memref<1x40x2xf32, #tpu.memory_space<vmem>>, vector<1x32x1xf32>
    %30 = vector.shape_cast %29 : vector<1x32x1xf32> to vector<32x1xf32>
    %31 = arith.mulf %11, %11 : vector<32x128xf32>
    %cst_26 = arith.constant dense<0.000000e+00> : vector<32xf32>
    %32 = vector.multi_reduction <add>, %31, %cst_26 [1] : vector<32x128xf32> to vector<32xf32>
    %33 = vector.shape_cast %32 : vector<32xf32> to vector<32x1xf32>
    %34 = arith.addf %30, %33 : vector<32x1xf32>
    %c0_27 = arith.constant 0 : index
    %c0_28 = arith.constant 0 : index
    %c1_29 = arith.constant 1 : index
    %35 = vector.load %arg8[%c0_27, %c0_28, %c1_29] : memref<1x40x2xf32, #tpu.memory_space<vmem>>, vector<1x32x1xf32>
    %36 = vector.shape_cast %35 : vector<1x32x1xf32> to vector<32x1xf32>
    %37 = vector.shape_cast %34 : vector<32x1xf32> to vector<1x32x1xf32>
    tpu.vector_store %arg8[%c0_27, %c0_28, %c1_29], %37 {strides = array<i32>} : memref<1x40x2xf32, #tpu.memory_space<vmem>>, vector<1x32x1xf32>,
    %c0_30 = arith.constant 0 : index
    %c32 = arith.constant 32 : index
    %c0_31 = arith.constant 0 : index
    %38 = vector.load %arg8[%c0_30, %c32, %c0_31] : memref<1x40x2xf32, #tpu.memory_space<vmem>>, vector<1x8x1xf32>
    %39 = vector.shape_cast %38 : vector<1x8x1xf32> to vector<8x1xf32>
    %cst_32 = arith.constant dense<0.000000e+00> : vector<8xf32>
    %40 = vector.multi_reduction <add>, %20, %cst_32 [1] : vector<8x512xf32> to vector<8xf32>
    %41 = vector.shape_cast %40 : vector<8xf32> to vector<8x1xf32>
    %42 = arith.addf %39, %41 : vector<8x1xf32>
    %c0_33 = arith.constant 0 : index
    %c32_34 = arith.constant 32 : index
    %c0_35 = arith.constant 0 : index
    %43 = vector.load %arg8[%c0_33, %c32_34, %c0_35] : memref<1x40x2xf32, #tpu.memory_space<vmem>>, vector<1x8x1xf32>
    %44 = vector.shape_cast %43 : vector<1x8x1xf32> to vector<8x1xf32>
    %45 = vector.shape_cast %42 : vector<8x1xf32> to vector<1x8x1xf32>
    tpu.vector_store %arg8[%c0_33, %c32_34, %c0_35], %45 {strides = array<i32>} : memref<1x40x2xf32, #tpu.memory_space<vmem>>, vector<1x8x1xf32>,
    %c0_36 = arith.constant 0 : index
    %c32_37 = arith.constant 32 : index
    %c1_38 = arith.constant 1 : index
    %46 = vector.load %arg8[%c0_36, %c32_37, %c1_38] : memref<1x40x2xf32, #tpu.memory_space<vmem>>, vector<1x8x1xf32>
    %47 = vector.shape_cast %46 : vector<1x8x1xf32> to vector<8x1xf32>
    %48 = arith.mulf %20, %20 : vector<8x512xf32>
    %cst_39 = arith.constant dense<0.000000e+00> : vector<8xf32>
    %49 = vector.multi_reduction <add>, %48, %cst_39 [1] : vector<8x512xf32> to vector<8xf32>
    %50 = vector.shape_cast %49 : vector<8xf32> to vector<8x1xf32>
    %51 = arith.addf %47, %50 : vector<8x1xf32>
    %c0_40 = arith.constant 0 : index
    %c32_41 = arith.constant 32 : index
    %c1_42 = arith.constant 1 : index
    %52 = vector.load %arg8[%c0_40, %c32_41, %c1_42] : memref<1x40x2xf32, #tpu.memory_space<vmem>>, vector<1x8x1xf32>
    %53 = vector.shape_cast %52 : vector<1x8x1xf32> to vector<8x1xf32>
    %54 = vector.shape_cast %51 : vector<8x1xf32> to vector<1x8x1xf32>
    tpu.vector_store %arg8[%c0_40, %c32_41, %c1_42], %54 {strides = array<i32>} : memref<1x40x2xf32, #tpu.memory_space<vmem>>, vector<1x8x1xf32>,
    return
  }
  func.func @transform_0(%arg0: i32, %arg1: i32) -> (i32, i32, i32) {
    %c0_i32 = arith.constant 0 : i32
    %c0_i32_0 = arith.constant 0 : i32
    return %arg0, %c0_i32, %arg1 : i32, i32, i32
  }
  func.func @transform_1(%arg0: i32, %arg1: i32) -> (i32, i32, i32) {
    %c0_i32 = arith.constant 0 : i32
    %c0_i32_0 = arith.constant 0 : i32
    return %arg0, %c0_i32, %arg1 : i32, i32, i32
  }
  func.func @transform_2(%arg0: i32, %arg1: i32) -> (i32, i32) {
    %c0_i32 = arith.constant 0 : i32
    %c0_i32_0 = arith.constant 0 : i32
    %c0_i32_1 = arith.constant 0 : i32
    return %c0_i32, %c0_i32_0 : i32, i32
  }
  func.func @transform_3(%arg0: i32, %arg1: i32) -> (i32, i32) {
    %c0_i32 = arith.constant 0 : i32
    %c0_i32_0 = arith.constant 0 : i32
    %c0_i32_1 = arith.constant 0 : i32
    return %c0_i32, %c0_i32_0 : i32, i32
  }
  func.func @transform_4(%arg0: i32, %arg1: i32) -> (i32, i32) {
    %c0_i32 = arith.constant 0 : i32
    %c0_i32_0 = arith.constant 0 : i32
    %c0_i32_1 = arith.constant 0 : i32
    return %c0_i32, %c0_i32_0 : i32, i32
  }
  func.func @transform_5(%arg0: i32, %arg1: i32) -> (i32, i32) {
    %c0_i32 = arith.constant 0 : i32
    %c0_i32_0 = arith.constant 0 : i32
    %c0_i32_1 = arith.constant 0 : i32
    return %c0_i32, %c0_i32_0 : i32, i32
  }
  func.func @transform_6(%arg0: i32, %arg1: i32) -> (i32, i32, i32) {
    %c0_i32 = arith.constant 0 : i32
    %c0_i32_0 = arith.constant 0 : i32
    %c0_i32_1 = arith.constant 0 : i32
    return %arg0, %c0_i32, %c0_i32_0 : i32, i32, i32
  }
}

module attributes {stable_mosaic.version = 11 : i64} {
  func.func @_write_kernel(%arg0: i32, %arg1: i32, %arg2: memref<1x8x128xf32, #tpu.memory_space<vmem>>, %arg3: memref<1x8x512xf32, #tpu.memory_space<vmem>>, %arg4: memref<32x8xf32, #tpu.memory_space<vmem>>, %arg5: memref<32x3xf32, #tpu.memory_space<vmem>>, %arg6: memref<8x8xf32, #tpu.memory_space<vmem>>, %arg7: memref<8x3xf32, #tpu.memory_space<vmem>>, %arg8: memref<1x32x128xf32, #tpu.memory_space<vmem>>, %arg9: memref<1x8x512xf32, #tpu.memory_space<vmem>>) attributes {dimension_semantics = [#tpu.dimension_semantics<parallel>, #tpu.dimension_semantics<parallel>], iteration_bounds = array<i64: 2, 2>, scalar_prefetch = 0 : i64, scratch_operands = 0 : i64, tpu.core_type = #tpu.core_type<tc>, window_params = [{transform_indices = @transform_0, window_bounds = array<i64: 1, 8, 128>}, {transform_indices = @transform_1, window_bounds = array<i64: 1, 8, 512>}, {pipeline_mode = #tpu.pipeline_mode<synchronous>, transform_indices = @transform_2, window_bounds = array<i64: 32, 8>}, {pipeline_mode = #tpu.pipeline_mode<synchronous>, transform_indices = @transform_3, window_bounds = array<i64: 32, 3>}, {pipeline_mode = #tpu.pipeline_mode<synchronous>, transform_indices = @transform_4, window_bounds = array<i64: 8, 8>}, {pipeline_mode = #tpu.pipeline_mode<synchronous>, transform_indices = @transform_5, window_bounds = array<i64: 8, 3>}, {transform_indices = @transform_6, window_bounds = array<i64: 1, 32, 128>}, {transform_indices = @transform_7, window_bounds = array<i64: 1, 8, 512>}]} {
    %c0 = arith.constant 0 : index
    %c0_0 = arith.constant 0 : index
    %0 = vector.load %arg4[%c0, %c0_0] : memref<32x8xf32, #tpu.memory_space<vmem>>, vector<32x8xf32>
    %c0_1 = arith.constant 0 : index
    %c0_2 = arith.constant 0 : index
    %c0_3 = arith.constant 0 : index
    %1 = vector.load %arg2[%c0_1, %c0_2, %c0_3] : memref<1x8x128xf32, #tpu.memory_space<vmem>>, vector<1x8x128xf32>
    %2 = vector.shape_cast %1 : vector<1x8x128xf32> to vector<8x128xf32>
    %cst = arith.constant dense<0.000000e+00> : vector<32x128xf32>
    %3 = tpu.matmul %0, %2, %cst {dimension_numbers = #tpu.dot_dimension_numbers<[1], [0], [0], [1], [0, 0, 1, 1], [], []>} : vector<32x8xf32>, vector<8x128xf32>, vector<32x128xf32> -> vector<32x128xf32>
    %c0_4 = arith.constant 0 : index
    %c0_5 = arith.constant 0 : index
    %4 = vector.load %arg5[%c0_4, %c0_5] : memref<32x3xf32, #tpu.memory_space<vmem>>, vector<32x1xf32>
    %5 = vector.broadcast %4 : vector<32x1xf32> to vector<32x128xf32>
    %6 = arith.addf %3, %5 : vector<32x128xf32>
    %cst_6 = arith.constant 0.000000e+00 : f32
    %7 = vector.broadcast %cst_6 : f32 to vector<32x128xf32>
    %8 = arith.maximumf %6, %7 : vector<32x128xf32>
    %c0_7 = arith.constant 0 : index
    %c1 = arith.constant 1 : index
    %9 = vector.load %arg5[%c0_7, %c1] : memref<32x3xf32, #tpu.memory_space<vmem>>, vector<32x1xf32>
    %10 = vector.broadcast %9 : vector<32x1xf32> to vector<32x128xf32>
    %11 = arith.mulf %8, %10 : vector<32x128xf32>
    %c0_8 = arith.constant 0 : index
    %c2 = arith.constant 2 : index
    %12 = vector.load %arg5[%c0_8, %c2] : memref<32x3xf32, #tpu.memory_space<vmem>>, vector<32x1xf32>
    %13 = vector.broadcast %12 : vector<32x1xf32> to vector<32x128xf32>
    %14 = arith.addf %11, %13 : vector<32x128xf32>
    %c0_9 = arith.constant 0 : index
    %c0_10 = arith.constant 0 : index
    %c0_11 = arith.constant 0 : index
    %15 = vector.load %arg8[%c0_9, %c0_10, %c0_11] : memref<1x32x128xf32, #tpu.memory_space<vmem>>, vector<1x32x128xf32>
    %16 = vector.shape_cast %15 : vector<1x32x128xf32> to vector<32x128xf32>
    %17 = vector.shape_cast %14 : vector<32x128xf32> to vector<1x32x128xf32>
    tpu.vector_store %arg8[%c0_9, %c0_10, %c0_11], %17 {strides = array<i32>} : memref<1x32x128xf32, #tpu.memory_space<vmem>>, vector<1x32x128xf32>,
    %c0_12 = arith.constant 0 : index
    %c0_13 = arith.constant 0 : index
    %18 = vector.load %arg6[%c0_12, %c0_13] : memref<8x8xf32, #tpu.memory_space<vmem>>, vector<8x8xf32>
    %c0_14 = arith.constant 0 : index
    %c0_15 = arith.constant 0 : index
    %c0_16 = arith.constant 0 : index
    %19 = vector.load %arg3[%c0_14, %c0_15, %c0_16] : memref<1x8x512xf32, #tpu.memory_space<vmem>>, vector<1x8x512xf32>
    %20 = vector.shape_cast %19 : vector<1x8x512xf32> to vector<8x512xf32>
    %cst_17 = arith.constant dense<0.000000e+00> : vector<8x512xf32>
    %21 = tpu.matmul %18, %20, %cst_17 {dimension_numbers = #tpu.dot_dimension_numbers<[1], [0], [0], [1], [0, 0, 1, 1], [], []>} : vector<8x8xf32>, vector<8x512xf32>, vector<8x512xf32> -> vector<8x512xf32>
    %c0_18 = arith.constant 0 : index
    %c0_19 = arith.constant 0 : index
    %22 = vector.load %arg7[%c0_18, %c0_19] : memref<8x3xf32, #tpu.memory_space<vmem>>, vector<8x1xf32>
    %23 = vector.broadcast %22 : vector<8x1xf32> to vector<8x512xf32>
    %24 = arith.addf %21, %23 : vector<8x512xf32>
    %cst_20 = arith.constant 0.000000e+00 : f32
    %25 = vector.broadcast %cst_20 : f32 to vector<8x512xf32>
    %26 = arith.maximumf %24, %25 : vector<8x512xf32>
    %c0_21 = arith.constant 0 : index
    %c1_22 = arith.constant 1 : index
    %27 = vector.load %arg7[%c0_21, %c1_22] : memref<8x3xf32, #tpu.memory_space<vmem>>, vector<8x1xf32>
    %28 = vector.broadcast %27 : vector<8x1xf32> to vector<8x512xf32>
    %29 = arith.mulf %26, %28 : vector<8x512xf32>
    %c0_23 = arith.constant 0 : index
    %c2_24 = arith.constant 2 : index
    %30 = vector.load %arg7[%c0_23, %c2_24] : memref<8x3xf32, #tpu.memory_space<vmem>>, vector<8x1xf32>
    %31 = vector.broadcast %30 : vector<8x1xf32> to vector<8x512xf32>
    %32 = arith.addf %29, %31 : vector<8x512xf32>
    %c0_25 = arith.constant 0 : index
    %c0_26 = arith.constant 0 : index
    %c0_27 = arith.constant 0 : index
    %33 = vector.load %arg9[%c0_25, %c0_26, %c0_27] : memref<1x8x512xf32, #tpu.memory_space<vmem>>, vector<1x8x512xf32>
    %34 = vector.shape_cast %33 : vector<1x8x512xf32> to vector<8x512xf32>
    %35 = vector.shape_cast %32 : vector<8x512xf32> to vector<1x8x512xf32>
    tpu.vector_store %arg9[%c0_25, %c0_26, %c0_27], %35 {strides = array<i32>} : memref<1x8x512xf32, #tpu.memory_space<vmem>>, vector<1x8x512xf32>,
    return
  }
  func.func @transform_0(%arg0: i32, %arg1: i32) -> (i32, i32, i32) {
    %c0_i32 = arith.constant 0 : i32
    %c0_i32_0 = arith.constant 0 : i32
    return %arg0, %c0_i32, %arg1 : i32, i32, i32
  }
  func.func @transform_1(%arg0: i32, %arg1: i32) -> (i32, i32, i32) {
    %c0_i32 = arith.constant 0 : i32
    %c0_i32_0 = arith.constant 0 : i32
    return %arg0, %c0_i32, %arg1 : i32, i32, i32
  }
  func.func @transform_2(%arg0: i32, %arg1: i32) -> (i32, i32) {
    %c0_i32 = arith.constant 0 : i32
    %c0_i32_0 = arith.constant 0 : i32
    %c0_i32_1 = arith.constant 0 : i32
    return %c0_i32, %c0_i32_0 : i32, i32
  }
  func.func @transform_3(%arg0: i32, %arg1: i32) -> (i32, i32) {
    %c0_i32 = arith.constant 0 : i32
    %c0_i32_0 = arith.constant 0 : i32
    %c0_i32_1 = arith.constant 0 : i32
    return %c0_i32, %c0_i32_0 : i32, i32
  }
  func.func @transform_4(%arg0: i32, %arg1: i32) -> (i32, i32) {
    %c0_i32 = arith.constant 0 : i32
    %c0_i32_0 = arith.constant 0 : i32
    %c0_i32_1 = arith.constant 0 : i32
    return %c0_i32, %c0_i32_0 : i32, i32
  }
  func.func @transform_5(%arg0: i32, %arg1: i32) -> (i32, i32) {
    %c0_i32 = arith.constant 0 : i32
    %c0_i32_0 = arith.constant 0 : i32
    %c0_i32_1 = arith.constant 0 : i32
    return %c0_i32, %c0_i32_0 : i32, i32
  }
  func.func @transform_6(%arg0: i32, %arg1: i32) -> (i32, i32, i32) {
    %c0_i32 = arith.constant 0 : i32
    %c0_i32_0 = arith.constant 0 : i32
    return %arg0, %c0_i32, %arg1 : i32, i32, i32
  }
  func.func @transform_7(%arg0: i32, %arg1: i32) -> (i32, i32, i32) {
    %c1_i32 = arith.constant 1 : i32
    %c0_i32 = arith.constant 0 : i32
    return %arg0, %c1_i32, %arg1 : i32, i32, i32
  }
}

</mosaic_0001>

<llo_original>
// kernel: tile.37
$region0: #{tile.37}
  %s0 = inlined_call_operand.vmem [shape: f32[4,8], index: 0, kind: input, shape index: {}]
  %s1 = inlined_call_operand.vmem [shape: f32[32,1], index: 1, kind: output, shape index: {}]
  $region1: #{tile.37} parent=0
    #allocation0 [shape = 'u8[4096]{0}', space=vmem, size = 0x1000, scoped, tag = 'scoped mem for output reshape']
    #allocation1 [shape = 'u8[4096]{0}', space=vmem, size = 0x1000, scoped, tag = 'scoped mem for input reshape']
    %s3 = sshllo.u32 0, 4
    %v4 = vld [vmem:[%s0] sm:%s3]
    %5 = vst [vmem:[#allocation1] sm:%s3] %v4
    %v6 = vld [vmem:[#allocation1] sm:$0x1]
    %vm7 = vcmask 64512
    %8 = vst.msk [vmem:[#allocation0] sm:$0x1] %vm7, %v6
    %s9 = scalar_lea.vmem [#allocation1], 3
    %v10 = vld [vmem:[%s9] sm:$0x1]
    %11 = vrot.lane.b32.xlu0 %v10, 24
    %v12 = vpop.permute.xlu0 %11
    %vm13 = vcmask 261312
    %14 = vst.msk [vmem:[#allocation0] sm:$0x1] %vm13, %v12
    %s15 = scalar_lea.vmem [#allocation1], 2
    %v16 = vld [vmem:[%s15] sm:$0x1]
    %17 = vrot.lane.b32.xlu0 %v16, 16
    %v18 = vpop.permute.xlu0 %17
    %vm19 = vcmask 195712
    %20 = vst.msk [vmem:[#allocation0] sm:$0x1] %vm19, %v18
    %s21 = scalar_lea.vmem [#allocation1], 1
    %v22 = vld [vmem:[%s21] sm:$0x1]
    %23 = vrot.lane.b32.xlu0 %v22, 8
    %v24 = vpop.permute.xlu0 %23
    %vm25 = vcmask 130112
    %26 = vst.msk [vmem:[#allocation0] sm:$0x1] %vm25, %v24
    %s28 = sshllo.u32 0, 1
    %v30 = vld [vmem:[#allocation0] sm:%s28]
    %s31 = sshllo.u32 0, 1
    %32 = vst [vmem:[%s1] sm:%s31] %v30

// kernel: tile.28
$region0: #{tile.28}
  #allocation0 [shape = 's32[1]{0}', space=sflag, size = 0x4, scoped, tag = 'scoped memory for tile.28']
  %s0 = inlined_call_operand.vmem [shape: f32[8], index: 0, kind: input, shape index: {}]
  %s1 = inlined_call_operand.vmem [shape: f32[4,8], index: 1, kind: output, shape index: {}]
  // Predicated region
  $region2: #{tile.28} parent=0 // pred_check
    _
  $region3: #{tile.28} parent=0 // pred_check_branch
    %3 = sbr.rel (0) target = $region5
  $region4: #{tile.28} parent=0 // pred_region
    _
  $region5: #{tile.28} parent=0 // pred_fallthru
    _
  %v4 = vld [vmem:[%s0] ss:$0 sm:$0xff]
  %5 = vst [vmem:[%s1] sm:$0xf] %v4

// kernel: _lambda_.2
$region0: #{_lambda_.2}
  #allocation0 [shape = 'u32[]', space=smem, size = 0x4, offset = 0x4, fixed_abs, tag = 'smem constant byte address 0x4 - core index']
  #allocation1 [shape = 'u32[144,128]{1,0:T(1,128)}', space=vmem, size = 0x12000, scoped, tag = 'internal scratch']
  %s0 = inlined_call_operand.vmem [shape: f32[2,8,256], index: 0, kind: input, shape index: {}]
  %s1 = inlined_call_operand.vmem [shape: f32[2,8,1024], index: 1, kind: input, shape index: {}]
  %s2 = inlined_call_operand.vmem [shape: f32[32,8], index: 2, kind: input, shape index: {}]
  %s3 = inlined_call_operand.vmem [shape: f32[32,1], index: 3, kind: input, shape index: {}]
  %s4 = inlined_call_operand.vmem [shape: f32[8,8], index: 4, kind: input, shape index: {}]
  %s5 = inlined_call_operand.vmem [shape: f32[8,1], index: 5, kind: input, shape index: {}]
  %s6 = inlined_call_operand.vmem [shape: f32[2,40,2], index: 6, kind: output, shape index: {}]
  %s7 = sld [smem:[#allocation0]]
  $region61: #{_lambda_.2} parent=0
    _
  %s9 = ssub.s32 1, %s7
  %s10 = scalar_select 0, %s9, %s7
  loop: start=0, step=1, limit=6
  $region2: #{_lambda_.2} parent=0 // loop_pre_header
    _
  $region3: #{_lambda_.2} parent=0 // loop_header
    %s12 = sphi 0, %s16
    %p13 = scmp.ge.s32.totalorder %s12, 6
    %s19 = sphi 0, %s31
    %s20 = sphi 0, %s27
    %s21 = sphi 0, %s19
    %s22 = sphi 0, %s20
    %s23 = sphi 0, %s21
    %s24 = sphi 0, %s22
    %s36 = sphi 0, %s38
    %s39 = sphi 0, %s36
    %s40 = sphi 0, %s39
    %s56 = sphi 0, %s40
    %s64 = sphi 0, %s66
    %s67 = sphi 0, %s64
    %s68 = sphi 0, %s67
    %s84 = sphi 0, %s68
    %s88 = sphi 0, %s88
    %s90 = sphi 0, %s88
    %s91 = sphi 0, %s90
    %s105 = sphi 0, %s91
    %s109 = sphi 0, %s109
    %s111 = sphi 0, %s109
    %s112 = sphi 0, %s111
    %s126 = sphi 0, %s112
    %s130 = sphi 0, %s130
    %s132 = sphi 0, %s130
    %s133 = sphi 0, %s132
    %s147 = sphi 0, %s133
    %s151 = sphi 0, %s151
    %s153 = sphi 0, %s151
    %s154 = sphi 0, %s153
    %s168 = sphi 0, %s154
    %s174 = sphi 0, %s176
    %s177 = sphi 0, %s174
    %s178 = sphi 0, %s177
    %s194 = sphi 0, %s178
  $region4: #{_lambda_.2} parent=0 // loop_header_branch
    %15 = sbr.rel (%p13) target = $region8
  $region5: #{_lambda_.2} parent=0 // loop_body
    %s17 = ssub.s32 %s12, 1
    %s18 = ssub.s32 %s12, 2
    %s25 = sadd.s32 1, %s20
    %p26 = scmp.ge.s32.totalorder %s25, 2
    %s27 = scalar_select %p26, 0, %s25
    %s28 = sadd.s32 1, %s19
    %s29 = scalar_select %p26, %s28, %s19
    %p30 = scmp.ge.s32.totalorder %s29, 2
    %s31 = scalar_select %p30, 0, %s29
    %s32 = ssub.s32 %s19, %s31
    %s33 = ssub.s32 %s20, %s27
    %s34 = sor.u32 %s32, %s33
    %p35 = scmp.eq.s32.totalorder %s34, 0
    %s37 = sadd.s32 %s36, 1
    %s38 = scalar_select %p35, %s36, %s37
    %p41 = pneg %p35
    %p42 = scmp.eq.s32.totalorder %s12, 3
    %p43 = por %p41, %p42
    %p44 = scmp.ne.s32.totalorder %s36, %s39
    %p45 = scmp.eq.s32.totalorder %s12, 0
    %p46 = por %p44, %p45
    %p47 = scmp.ne.s32.totalorder %s36, %s39
    %p48 = scmp.eq.s32.totalorder %s17, 3
    %p49 = por %p47, %p48
    %p50 = scmp.ne.s32.totalorder %s39, %s40
    %p51 = scmp.eq.s32.totalorder %s17, 0
    %p52 = por %p50, %p51
    %p53 = scmp.ne.s32.totalorder %s39, %s40
    %p54 = scmp.eq.s32.totalorder %s18, 3
    %p55 = por %p53, %p54
    %p57 = scmp.ne.s32.totalorder %s40, %s56
    %p58 = scmp.eq.s32.totalorder %s18, 0
    %p59 = por %p57, %p58
    %s60 = ssub.s32 %s19, %s31
    %s61 = ssub.s32 %s20, %s27
    %s62 = sor.u32 %s60, %s61
    %p63 = scmp.eq.s32.totalorder %s62, 0
    %s65 = sadd.s32 %s64, 1
    %s66 = scalar_select %p63, %s64, %s65
    %p69 = pneg %p63
    %p70 = scmp.eq.s32.totalorder %s12, 3
    %p71 = por %p69, %p70
    %p72 = scmp.ne.s32.totalorder %s64, %s67
    %p73 = scmp.eq.s32.totalorder %s12, 0
    %p74 = por %p72, %p73
    %p75 = scmp.ne.s32.totalorder %s64, %s67
    %p76 = scmp.eq.s32.totalorder %s17, 3
    %p77 = por %p75, %p76
    %p78 = scmp.ne.s32.totalorder %s67, %s68
    %p79 = scmp.eq.s32.totalorder %s17, 0
    %p80 = por %p78, %p79
    %p81 = scmp.ne.s32.totalorder %s67, %s68
    %p82 = scmp.eq.s32.totalorder %s18, 3
    %p83 = por %p81, %p82
    %p85 = scmp.ne.s32.totalorder %s68, %s84
    %p86 = scmp.eq.s32.totalorder %s18, 0
    %p87 = por %p85, %p86
    %s89 = sadd.s32 %s88, 1
    %p92 = scmp.eq.s32.totalorder %s12, 3
    %p93 = scmp.ne.s32.totalorder %s88, %s90
    %p94 = scmp.eq.s32.totalorder %s12, 0
    %p95 = por %p93, %p94
    %p96 = scmp.ne.s32.totalorder %s88, %s90
    %p97 = scmp.eq.s32.totalorder %s17, 3
    %p98 = por %p96, %p97
    %p99 = scmp.ne.s32.totalorder %s90, %s91
    %p100 = scmp.eq.s32.totalorder %s17, 0
    %p101 = por %p99, %p100
    %p102 = scmp.ne.s32.totalorder %s90, %s91
    %p103 = scmp.eq.s32.totalorder %s18, 3
    %p104 = por %p102, %p103
    %p106 = scmp.ne.s32.totalorder %s91, %s105
    %p107 = scmp.eq.s32.totalorder %s18, 0
    %p108 = por %p106, %p107
    %s110 = sadd.s32 %s109, 1
    %p113 = scmp.eq.s32.totalorder %s12, 3
    %p114 = scmp.ne.s32.totalorder %s109, %s111
    %p115 = scmp.eq.s32.totalorder %s12, 0
    %p116 = por %p114, %p115
    %p117 = scmp.ne.s32.totalorder %s109, %s111
    %p118 = scmp.eq.s32.totalorder %s17, 3
    %p119 = por %p117, %p118
    %p120 = scmp.ne.s32.totalorder %s111, %s112
    %p121 = scmp.eq.s32.totalorder %s17, 0
    %p122 = por %p120, %p121
    %p123 = scmp.ne.s32.totalorder %s111, %s112
    %p124 = scmp.eq.s32.totalorder %s18, 3
    %p125 = por %p123, %p124
    %p127 = scmp.ne.s32.totalorder %s112, %s126
    %p128 = scmp.eq.s32.totalorder %s18, 0
    %p129 = por %p127, %p128
    %s131 = sadd.s32 %s130, 1
    %p134 = scmp.eq.s32.totalorder %s12, 3
    %p135 = scmp.ne.s32.totalorder %s130, %s132
    %p136 = scmp.eq.s32.totalorder %s12, 0
    %p137 = por %p135, %p136
    %p138 = scmp.ne.s32.totalorder %s130, %s132
    %p139 = scmp.eq.s32.totalorder %s17, 3
    %p140 = por %p138, %p139
    %p141 = scmp.ne.s32.totalorder %s132, %s133
    %p142 = scmp.eq.s32.totalorder %s17, 0
    %p143 = por %p141, %p142
    %p144 = scmp.ne.s32.totalorder %s132, %s133
    %p145 = scmp.eq.s32.totalorder %s18, 3
    %p146 = por %p144, %p145
    %p148 = scmp.ne.s32.totalorder %s133, %s147
    %p149 = scmp.eq.s32.totalorder %s18, 0
    %p150 = por %p148, %p149
    %s152 = sadd.s32 %s151, 1
    %p155 = scmp.eq.s32.totalorder %s12, 3
    %p156 = scmp.ne.s32.totalorder %s151, %s153
    %p157 = scmp.eq.s32.totalorder %s12, 0
    %p158 = por %p156, %p157
    %p159 = scmp.ne.s32.totalorder %s151, %s153
    %p160 = scmp.eq.s32.totalorder %s17, 3
    %p161 = por %p159, %p160
    %p162 = scmp.ne.s32.totalorder %s153, %s154
    %p163 = scmp.eq.s32.totalorder %s17, 0
    %p164 = por %p162, %p163
    %p165 = scmp.ne.s32.totalorder %s153, %s154
    %p166 = scmp.eq.s32.totalorder %s18, 3
    %p167 = por %p165, %p166
    %p169 = scmp.ne.s32.totalorder %s154, %s168
    %p170 = scmp.eq.s32.totalorder %s18, 0
    %p171 = por %p169, %p170
    %s172 = ssub.s32 %s19, %s31
    %p173 = scmp.eq.s32.totalorder %s172, 0
    %s175 = sadd.s32 %s174, 1
    %s176 = scalar_select %p173, %s174, %s175
    %p179 = pneg %p173
    %p180 = scmp.eq.s32.totalorder %s12, 3
    %p181 = por %p179, %p180
    %p182 = scmp.ne.s32.totalorder %s174, %s177
    %p183 = scmp.eq.s32.totalorder %s12, 0
    %p184 = por %p182, %p183
    %p185 = scmp.ne.s32.totalorder %s174, %s177
    %p186 = scmp.eq.s32.totalorder %s17, 3
    %p187 = por %p185, %p186
    %p188 = scmp.ne.s32.totalorder %s177, %s178
    %p189 = scmp.eq.s32.totalorder %s17, 0
    %p190 = por %p188, %p189
    %p191 = scmp.ne.s32.totalorder %s177, %s178
    %p192 = scmp.eq.s32.totalorder %s18, 3
    %p193 = por %p191, %p192
    %p195 = scmp.ne.s32.totalorder %s178, %s194
    %p196 = scmp.eq.s32.totalorder %s18, 0
    %p197 = por %p195, %p196
    %p198 = scmp.le.s32.totalorder 1, %s12
    %p199 = scmp.lt.s32.totalorder %s12, 5
    %p200 = pnand %p198, %p199
    %p201 = pneg %p200
    // Predicated region
    $region9: #{_lambda_.2} parent=5 // pred_check
      _
    $region10: #{_lambda_.2} parent=5 // pred_check_branch
      %203 = sbr.rel (%p200) target = $region12
    $region11: #{_lambda_.2} parent=5 // pred_region
      %s204 = ssub.s32 %s12, 1
      // Predicated region
      $region13: #{_lambda_.2} parent=11 // pred_check
        %p205 = pneg %p101
      $region14: #{_lambda_.2} parent=11 // pred_check_branch
        %207 = sbr.rel (%p205) target = $region16
      $region15: #{_lambda_.2} parent=11 // pred_region
        _
      $region16: #{_lambda_.2} parent=11 // pred_fallthru
        _
      // Predicated region
      $region17: #{_lambda_.2} parent=11 // pred_check
        %p208 = pneg %p122
      $region18: #{_lambda_.2} parent=11 // pred_check_branch
        %210 = sbr.rel (%p208) target = $region20
      $region19: #{_lambda_.2} parent=11 // pred_region
        _
      $region20: #{_lambda_.2} parent=11 // pred_fallthru
        _
      // Predicated region
      $region21: #{_lambda_.2} parent=11 // pred_check
        %p211 = pneg %p143
      $region22: #{_lambda_.2} parent=11 // pred_check_branch
        %213 = sbr.rel (%p211) target = $region24
      $region23: #{_lambda_.2} parent=11 // pred_region
        _
      $region24: #{_lambda_.2} parent=11 // pred_fallthru
        _
      // Predicated region
      $region25: #{_lambda_.2} parent=11 // pred_check
        %p214 = pneg %p164
      $region26: #{_lambda_.2} parent=11 // pred_check_branch
        %216 = sbr.rel (%p214) target = $region28
      $region27: #{_lambda_.2} parent=11 // pred_region
        _
      $region28: #{_lambda_.2} parent=11 // pred_fallthru
        _
    $region12: #{_lambda_.2} parent=5 // pred_fallthru
      _
    %p217 = scmp.lt.s32.totalorder %s12, 4
    // Predicated region
    $region29: #{_lambda_.2} parent=5 // pred_check
      %p218 = pneg %p217
    $region30: #{_lambda_.2} parent=5 // pred_check_branch
      %220 = sbr.rel (%p218) target = $region32
    $region31: #{_lambda_.2} parent=5 // pred_region
      // Predicated region
      $region33: #{_lambda_.2} parent=31 // pred_check
        %p221 = pneg %p46
      $region34: #{_lambda_.2} parent=31 // pred_check_branch
        %223 = sbr.rel (%p221) target = $region36
      $region35: #{_lambda_.2} parent=31 // pred_region
        %p224 = scmp.lt.s32.totalorder %s19, 1
        %s225 = scalar_select %p224, %s19, 1
        %p226 = scmp.lt.s32.totalorder %s20, 1
        %s227 = scalar_select %p226, %s20, 1
        %s228 = smul.addr %s225, 2
        %s229 = sadd.s32 %s227, %s228
        %s230 = smul.addr %s229, 8
        %s231 = scalar_lea.vmem %s0, %s230
      $region36: #{_lambda_.2} parent=31 // pred_fallthru
        _
      // Predicated region
      $region37: #{_lambda_.2} parent=31 // pred_check
        %p232 = pneg %p74
      $region38: #{_lambda_.2} parent=31 // pred_check_branch
        %234 = sbr.rel (%p232) target = $region40
      $region39: #{_lambda_.2} parent=31 // pred_region
        %s235 = smul.u32 4, %s20
        %p236 = scmp.lt.s32.totalorder %s19, 1
        %s237 = scalar_select %p236, %s19, 1
        %p238 = scmp.lt.s32.totalorder %s235, 7
        %s239 = scalar_select %p238, %s235, 7
        %s240 = smul.addr %s237, 8
        %s241 = sadd.s32 %s239, %s240
        %s242 = smul.addr %s241, 8
        %s243 = scalar_lea.vmem %s1, %s242
        %s244 = smul.u32 4, %s20
      $region40: #{_lambda_.2} parent=31 // pred_fallthru
        _
    $region32: #{_lambda_.2} parent=5 // pred_fallthru
      _
    %p245 = scmp.le.s32.totalorder 1, %s12
    %p246 = scmp.lt.s32.totalorder %s12, 5
    %p247 = pnand %p245, %p246
    %p248 = pneg %p247
    // Predicated region
    $region41: #{_lambda_.2} parent=5 // pred_check
      _
    $region42: #{_lambda_.2} parent=5 // pred_check_branch
      %250 = sbr.rel (%p247) target = $region44
    $region43: #{_lambda_.2} parent=5 // pred_region
      %s251 = ssub.s32 %s12, 1
      %p252 = scmp.lt.s32.totalorder %s21, 1
      %s253 = scalar_select %p252, %s21, 1
      %p254 = scmp.lt.s32.totalorder %s22, 1
      %s255 = scalar_select %p254, %s22, 1
      %s256 = smul.addr %s253, 2
      %s257 = sadd.s32 %s255, %s256
      %s258 = smul.addr %s257, 8
      %s259 = scalar_lea.vmem %s0, %s258
      %p260 = pneg %p52
      %p261 = pneg %p49
      %s262 = smul.u32 4, %s22
      %p263 = scmp.lt.s32.totalorder %s21, 1
      %s264 = scalar_select %p263, %s21, 1
      %p265 = scmp.lt.s32.totalorder %s262, 7
      %s266 = scalar_select %p265, %s262, 7
      %s267 = smul.addr %s264, 8
      %s268 = sadd.s32 %s266, %s267
      %s269 = smul.addr %s268, 8
      %s270 = scalar_lea.vmem %s1, %s269
      %p271 = pneg %p80
      %p272 = pneg %p77
      %p273 = pneg %p101
      %p274 = pneg %p98
      %p275 = pneg %p122
      %p276 = pneg %p119
      %p277 = pneg %p143
      %p278 = pneg %p140
      %p279 = pneg %p164
      %p280 = pneg %p161
      %p281 = pneg %p190
      %p282 = pneg %p187
      %p283 = scmp.lt.s32.totalorder %s21, 1
      %s284 = scalar_select %p283, %s21, 1
      %s285 = smul.addr %s284, 5
      %s286 = smul.addr %s285, 8
      %s287 = scalar_lea.vmem %s6, %s286
      %p288 = scmp.lt.s32.totalorder %s21, 1
      %s289 = scalar_select %p288, %s21, 1
      %p290 = scmp.lt.s32.totalorder %s22, 1
      %s291 = scalar_select %p290, %s22, 1
      %s292 = smul.addr %s289, 2
      %s293 = sadd.s32 %s291, %s292
      %s294 = smul.addr %s293, 8
      %s295 = scalar_lea.vmem %s0, %s294
      %s296 = smul.u32 4, %s22
      %p297 = scmp.lt.s32.totalorder %s21, 1
      %s298 = scalar_select %p297, %s21, 1
      %p299 = scmp.lt.s32.totalorder %s296, 7
      %s300 = scalar_select %p299, %s296, 7
      %s301 = smul.addr %s298, 8
      %s302 = sadd.s32 %s300, %s301
      %s303 = smul.addr %s302, 8
      %s304 = scalar_lea.vmem %s1, %s303
      %s305 = smul.u32 4, %s22
      %p306 = scmp.lt.s32.totalorder %s21, 1
      %s307 = scalar_select %p306, %s21, 1
      %s308 = smul.addr %s307, 5
      %s309 = smul.addr %s308, 8
      %s310 = scalar_lea.vmem %s6, %s309
      %p311 = scmp.eq.s32.totalorder %s22, 0
      // Predicated region
      $region45: #{_lambda_.2} parent=43 // pred_check
        %p312 = pneg %p311
      $region46: #{_lambda_.2} parent=43 // pred_check_branch
        %314 = sbr.rel (%p312) target = $region48
      $region47: #{_lambda_.2} parent=43 // pred_region
        %vm315 = vcmask 15360
        %316 = vst.msk [vmem:[%s310] sm:$0xff] %vm315, 0.0
        %317 = vst.msk [vmem:[%s310 + $0x8] sm:$0xff] %vm315, 0.0
        %318 = vst.msk [vmem:[%s310 + $0x10] sm:$0xff] %vm315, 0.0
        %319 = vst.msk [vmem:[%s310 + $0x18] sm:$0xff] %vm315, 0.0
        %320 = vst.msk [vmem:[%s310 + $0x20] sm:$0xff] %vm315, 0.0
      $region48: #{_lambda_.2} parent=43 // pred_fallthru
        _
      %v321 = vld [vmem:[%s2] sm:$0xff]
      %v322 = vld [vmem:[%s2 + $0x8] sm:$0xff]
      %v323 = vld [vmem:[%s2 + $0x10] sm:$0xff]
      %v324 = vld [vmem:[%s2 + $0x18] sm:$0xff]
      %v325 = vld [vmem:[%s295] sm:$0xff]
      %v326 = vld [vmem:[%s3] sm:$0xff]
      %v327 = vld [vmem:[%s3 + $0x8] sm:$0xff]
      %v328 = vld [vmem:[%s3 + $0x10] sm:$0xff]
      %v329 = vld [vmem:[%s3 + $0x18] sm:$0xff]
      %331 = vset.pattern.permute.xlu0 0
      %332 = vperm.xlu0 %331, %v326
      %v333 = vpop.permute.xlu0 %332
      %336 = vset.pattern.permute.xlu0 0
      %337 = vperm.xlu0 %336, %v327
      %v338 = vpop.permute.xlu0 %337
      %341 = vset.pattern.permute.xlu0 0
      %342 = vperm.xlu0 %341, %v328
      %v343 = vpop.permute.xlu0 %342
      %346 = vset.pattern.permute.xlu0 0
      %347 = vperm.xlu0 %346, %v329
      %v348 = vpop.permute.xlu0 %347
      %vm350 = vcmask 64512
      %v352 = vsel %vm350, %v321, 0
      %v355 = vsel %vm350, %v322, 0
      %v358 = vsel %vm350, %v323, 0
      %v361 = vsel %vm350, %v324, 0
      %363 = vmatprep.subr.mxu0 0.0
      %364 = vmatpush1.msra.mxu0 %v325
      %365 = vmatprep.subr.mxu0 0.0
      %366 = vmatpush1.msra.mxu0 0.0
      %367 = vmatprep.subr.mxu0 0.0
      %368 = vmatpush1.msra.mxu0 0.0
      %369 = vmatprep.subr.mxu0 0.0
      %370 = vmatpush1.msra.mxu0 0.0
      %371 = vmatprep.subr.mxu0 0.0
      %372 = vmatpush1.msra.mxu0 0.0
      %373 = vmatprep.subr.mxu0 0.0
      %374 = vmatpush1.msra.mxu0 0.0
      %375 = vmatprep.subr.mxu0 0.0
      %376 = vmatpush1.msra.mxu0 0.0
      %377 = vmatprep.subr.mxu0 0.0
      %378 = vmatpush1.msra.mxu0 0.0
      %379 = vmatprep.subr.mxu0 0.0
      %380 = vmatpush1.msra.mxu0 0.0
      %381 = vmatprep.subr.mxu0 0.0
      %382 = vmatpush1.msra.mxu0 0.0
      %383 = vmatprep.subr.mxu0 0.0
      %384 = vmatpush1.msra.mxu0 0.0
      %385 = vmatprep.subr.mxu0 0.0
      %386 = vmatpush1.msra.mxu0 0.0
      %387 = vmatprep.subr.mxu0 0.0
      %388 = vmatpush1.msra.mxu0 0.0
      %389 = vmatprep.subr.mxu0 0.0
      %390 = vmatpush1.msra.mxu0 0.0
      %391 = vmatprep.subr.mxu0 0.0
      %392 = vmatpush1.msra.mxu0 0.0
      %393 = vmatprep.subr.mxu0 0.0
      %394 = vmatpush1.msra.mxu0 0.0
      %395 = vmatprep.subr.mxu0 0.0
      %396 = vmatpush1.msra.mxu0 0.0
      %397 = vmatprep.subr.mxu0 0.0
      %398 = vmatpush1.msra.mxu0 0.0
      %399 = vmatprep.subr.mxu0 0.0
      %400 = vmatpush1.msra.mxu0 0.0
      %401 = vmatprep.subr.mxu0 0.0
      %402 = vmatpush1.msra.mxu0 0.0
      %403 = vmatprep.subr.mxu0 0.0
      %404 = vmatpush1.msra.mxu0 0.0
      %405 = vmatprep.subr.mxu0 0.0
      %406 = vmatpush1.msra.mxu0 0.0
      %407 = vmatprep.subr.mxu0 0.0
      %408 = vmatpush1.msra.mxu0 0.0
      %409 = vmatprep.subr.mxu0 0.0
      %410 = vmatpush1.msra.mxu0 0.0
      %411 = vmatprep.subr.mxu0 0.0
      %412 = vmatpush1.msra.mxu0 0.0
      %413 = vmatprep.subr.mxu0 0.0
      %414 = vmatpush1.msra.mxu0 0.0
      %415 = vmatprep.subr.mxu0 0.0
      %416 = vmatpush1.msra.mxu0 0.0
      %417 = vmatprep.subr.mxu0 0.0
      %418 = vmatpush1.msra.mxu0 0.0
      %419 = vmatprep.subr.mxu0 0.0
      %420 = vmatpush1.msra.mxu0 0.0
      %421 = vmatprep.subr.mxu0 0.0
      %422 = vmatpush1.msra.mxu0 0.0
      %423 = vmatprep.subr.mxu0 0.0
      %424 = vmatpush1.msra.mxu0 0.0
      %425 = vmatprep.subr.mxu0 0.0
      %426 = vmatpush1.msra.mxu0 0.0
      %427 = vmatprep.mubr.f32.mxu0 0.0
      %428 = vmatmul.mubr.f32.gmra.mrb[0].mxu0 %v352
      %v429 = vpop.f32.mrb[0].mxu0
      %v430 = vadd.f32 %v333, %v429
      %v431 = vpop.f32.mrb[0].mxu0
      %432 = vmatprep.mubr.f32.mxu0 0.0
      %433 = vmatmul.mubr.f32.gmra.mrb[0].mxu0 %v355
      %v434 = vpop.f32.mrb[0].mxu0
      %v435 = vadd.f32 %v338, %v434
      %v436 = vpop.f32.mrb[0].mxu0
      %437 = vmatprep.mubr.f32.mxu0 0.0
      %438 = vmatmul.mubr.f32.gmra.mrb[0].mxu0 %v358
      %v439 = vpop.f32.mrb[0].mxu0
      %v440 = vadd.f32 %v343, %v439
      %v441 = vpop.f32.mrb[0].mxu0
      %442 = vmatprep.mubr.f32.mxu0 0.0
      %443 = vmatmul.mubr.f32.gmra.mrb[0].mxu0 %v361
      %v444 = vpop.f32.mrb[0].mxu0
      %v445 = vadd.f32 %v348, %v444
      %v446 = vpop.f32.mrb[0].mxu0
      %447 = vdwg.mxu0
      %v448 = vmax.f32 %v430, 0.0
      %v449 = vmax.f32 %v435, 0.0
      %v450 = vmax.f32 %v440, 0.0
      %v451 = vmax.f32 %v445, 0.0
      %v452 = vld [vmem:[%s4] sm:$0xff]
      %v453 = vld [vmem:[%s304] sm:$0xff]
      %v454 = vld [vmem:[%s304 + $0x8] sm:$0xff]
      %v455 = vld [vmem:[%s304 + $0x10] sm:$0xff]
      %v456 = vld [vmem:[%s304 + $0x18] sm:$0xff]
      %v457 = vld [vmem:[%s5] sm:$0xff]
      %459 = vset.pattern.permute.xlu0 0
      %460 = vperm.xlu0 %459, %v457
      %v461 = vpop.permute.xlu0 %460
      %v464 = vsel %vm350, %v452, 0
      %466 = vmatprep.subr.mxu0 %v454
      %467 = vmatpush1.msra.mxu0 %v453
      %468 = vmatprep.subr.mxu0 0.0
      %469 = vmatpush1.msra.mxu0 0.0
      %470 = vmatprep.subr.mxu0 0.0
      %471 = vmatpush1.msra.mxu0 0.0
      %472 = vmatprep.subr.mxu0 0.0
      %473 = vmatpush1.msra.mxu0 0.0
      %474 = vmatprep.subr.mxu0 0.0
      %475 = vmatpush1.msra.mxu0 0.0
      %476 = vmatprep.subr.mxu0 0.0
      %477 = vmatpush1.msra.mxu0 0.0
      %478 = vmatprep.subr.mxu0 0.0
      %479 = vmatpush1.msra.mxu0 0.0
      %480 = vmatprep.subr.mxu0 0.0
      %481 = vmatpush1.msra.mxu0 0.0
      %482 = vmatprep.subr.mxu0 0.0
      %483 = vmatpush1.msra.mxu0 0.0
      %484 = vmatprep.subr.mxu0 0.0
      %485 = vmatpush1.msra.mxu0 0.0
      %486 = vmatprep.subr.mxu0 0.0
      %487 = vmatpush1.msra.mxu0 0.0
      %488 = vmatprep.subr.mxu0 0.0
      %489 = vmatpush1.msra.mxu0 0.0
      %490 = vmatprep.subr.mxu0 0.0
      %491 = vmatpush1.msra.mxu0 0.0
      %492 = vmatprep.subr.mxu0 0.0
      %493 = vmatpush1.msra.mxu0 0.0
      %494 = vmatprep.subr.mxu0 0.0
      %495 = vmatpush1.msra.mxu0 0.0
      %496 = vmatprep.subr.mxu0 0.0
      %497 = vmatpush1.msra.mxu0 0.0
      %498 = vmatprep.subr.mxu0 0.0
      %499 = vmatpush1.msra.mxu0 0.0
      %500 = vmatprep.subr.mxu0 0.0
      %501 = vmatpush1.msra.mxu0 0.0
      %502 = vmatprep.subr.mxu0 0.0
      %503 = vmatpush1.msra.mxu0 0.0
      %504 = vmatprep.subr.mxu0 0.0
      %505 = vmatpush1.msra.mxu0 0.0
      %506 = vmatprep.subr.mxu0 0.0
      %507 = vmatpush1.msra.mxu0 0.0
      %508 = vmatprep.subr.mxu0 0.0
      %509 = vmatpush1.msra.mxu0 0.0
      %510 = vmatprep.subr.mxu0 0.0
      %511 = vmatpush1.msra.mxu0 0.0
      %512 = vmatprep.subr.mxu0 0.0
      %513 = vmatpush1.msra.mxu0 0.0
      %514 = vmatprep.subr.mxu0 0.0
      %515 = vmatpush1.msra.mxu0 0.0
      %516 = vmatprep.subr.mxu0 0.0
      %517 = vmatpush1.msra.mxu0 0.0
      %518 = vmatprep.subr.mxu0 0.0
      %519 = vmatpush1.msra.mxu0 0.0
      %520 = vmatprep.subr.mxu0 0.0
      %521 = vmatpush1.msra.mxu0 0.0
      %522 = vmatprep.subr.mxu0 0.0
      %523 = vmatpush1.msra.mxu0 0.0
      %524 = vmatprep.subr.mxu0 0.0
      %525 = vmatpush1.msra.mxu0 0.0
      %526 = vmatprep.subr.mxu0 0.0
      %527 = vmatpush1.msra.mxu0 0.0
      %528 = vmatprep.subr.mxu0 0.0
      %529 = vmatpush1.msra.mxu0 0.0
      %530 = vmatprep.mubr.f32.mxu0 0.0
      %531 = vmatmul.mubr.f32.gmra.mrb[0].mxu0 %v464
      %v532 = vpop.f32.mrb[0].mxu0
      %v533 = vadd.f32 %v461, %v532
      %v534 = vpop.f32.mrb[0].mxu0
      %v535 = vadd.f32 %v461, %v534
      %536 = vdwg.mxu0
      %537 = vmatprep.subr.mxu0 %v456
      %538 = vmatpush1.msra.mxu0 %v455
      %539 = vmatprep.subr.mxu0 0.0
      %540 = vmatpush1.msra.mxu0 0.0
      %541 = vmatprep.subr.mxu0 0.0
      %542 = vmatpush1.msra.mxu0 0.0
      %543 = vmatprep.subr.mxu0 0.0
      %544 = vmatpush1.msra.mxu0 0.0
      %545 = vmatprep.subr.mxu0 0.0
      %546 = vmatpush1.msra.mxu0 0.0
      %547 = vmatprep.subr.mxu0 0.0
      %548 = vmatpush1.msra.mxu0 0.0
      %549 = vmatprep.subr.mxu0 0.0
      %550 = vmatpush1.msra.mxu0 0.0
      %551 = vmatprep.subr.mxu0 0.0
      %552 = vmatpush1.msra.mxu0 0.0
      %553 = vmatprep.subr.mxu0 0.0
      %554 = vmatpush1.msra.mxu0 0.0
      %555 = vmatprep.subr.mxu0 0.0
      %556 = vmatpush1.msra.mxu0 0.0
      %557 = vmatprep.subr.mxu0 0.0
      %558 = vmatpush1.msra.mxu0 0.0
      %559 = vmatprep.subr.mxu0 0.0
      %560 = vmatpush1.msra.mxu0 0.0
      %561 = vmatprep.subr.mxu0 0.0
      %562 = vmatpush1.msra.mxu0 0.0
      %563 = vmatprep.subr.mxu0 0.0
      %564 = vmatpush1.msra.mxu0 0.0
      %565 = vmatprep.subr.mxu0 0.0
      %566 = vmatpush1.msra.mxu0 0.0
      %567 = vmatprep.subr.mxu0 0.0
      %568 = vmatpush1.msra.mxu0 0.0
      %569 = vmatprep.subr.mxu0 0.0
      %570 = vmatpush1.msra.mxu0 0.0
      %571 = vmatprep.subr.mxu0 0.0
      %572 = vmatpush1.msra.mxu0 0.0
      %573 = vmatprep.subr.mxu0 0.0
      %574 = vmatpush1.msra.mxu0 0.0
      %575 = vmatprep.subr.mxu0 0.0
      %576 = vmatpush1.msra.mxu0 0.0
      %577 = vmatprep.subr.mxu0 0.0
      %578 = vmatpush1.msra.mxu0 0.0
      %579 = vmatprep.subr.mxu0 0.0
      %580 = vmatpush1.msra.mxu0 0.0
      %581 = vmatprep.subr.mxu0 0.0
      %582 = vmatpush1.msra.mxu0 0.0
      %583 = vmatprep.subr.mxu0 0.0
      %584 = vmatpush1.msra.mxu0 0.0
      %585 = vmatprep.subr.mxu0 0.0
      %586 = vmatpush1.msra.mxu0 0.0
      %587 = vmatprep.subr.mxu0 0.0
      %588 = vmatpush1.msra.mxu0 0.0
      %589 = vmatprep.subr.mxu0 0.0
      %590 = vmatpush1.msra.mxu0 0.0
      %591 = vmatprep.subr.mxu0 0.0
      %592 = vmatpush1.msra.mxu0 0.0
      %593 = vmatprep.subr.mxu0 0.0
      %594 = vmatpush1.msra.mxu0 0.0
      %595 = vmatprep.subr.mxu0 0.0
      %596 = vmatpush1.msra.mxu0 0.0
      %597 = vmatprep.subr.mxu0 0.0
      %598 = vmatpush1.msra.mxu0 0.0
      %599 = vmatprep.subr.mxu0 0.0
      %600 = vmatpush1.msra.mxu0 0.0
      %601 = vmatprep.mubr.f32.mxu0 0.0
      %602 = vmatmul.mubr.f32.gmra.mrb[0].mxu0 %v464
      %v603 = vpop.f32.mrb[0].mxu0
      %v604 = vadd.f32 %v461, %v603
      %v605 = vpop.f32.mrb[0].mxu0
      %v606 = vadd.f32 %v461, %v605
      %607 = vdwg.mxu0
      %v608 = vmax.f32 %v533, 0.0
      %v609 = vmax.f32 %v535, 0.0
      %v610 = vmax.f32 %v604, 0.0
      %v611 = vmax.f32 %v606, 0.0
      %v612 = vld [vmem:[%s310] sm:$0xff]
      %v613 = vld [vmem:[%s310 + $0x8] sm:$0xff]
      %v614 = vld [vmem:[%s310 + $0x10] sm:$0xff]
      %v615 = vld [vmem:[%s310 + $0x18] sm:$0xff]
      %616 = vadd.xlane.f32.xlu0 %v448
      %v617 = vpop.xlane.xlu0 %616
      %618 = vadd.xlane.f32.xlu0 %v449
      %v619 = vpop.xlane.xlu0 %618
      %620 = vadd.xlane.f32.xlu0 %v450
      %v621 = vpop.xlane.xlu0 %620
      %622 = vadd.xlane.f32.xlu0 %v451
      %v623 = vpop.xlane.xlu0 %622
      %v624 = vadd.f32 %v612, %v617
      %v625 = vadd.f32 %v613, %v619
      %v626 = vadd.f32 %v614, %v621
      %v627 = vadd.f32 %v615, %v623
      %vm628 = vcmask 7168
      %629 = vst.msk [vmem:[%s310] sm:$0xff] %vm628, %v624
      %630 = vst.msk [vmem:[%s310 + $0x8] sm:$0xff] %vm628, %v625
      %631 = vst.msk [vmem:[%s310 + $0x10] sm:$0xff] %vm628, %v626
      %632 = vst.msk [vmem:[%s310 + $0x18] sm:$0xff] %vm628, %v627
      %v633 = vld [vmem:[%s310] sm:$0xff]
      %v634 = vld [vmem:[%s310 + $0x8] sm:$0xff]
      %v635 = vld [vmem:[%s310 + $0x10] sm:$0xff]
      %v636 = vld [vmem:[%s310 + $0x18] sm:$0xff]
      %v637 = vmul.f32 %v448, %v448
      %v638 = vmul.f32 %v449, %v449
      %v639 = vmul.f32 %v450, %v450
      %v640 = vmul.f32 %v451, %v451
      %641 = vadd.xlane.f32.xlu0 %v637
      %v642 = vpop.xlane.xlu0 %641
      %643 = vadd.xlane.f32.xlu0 %v638
      %v644 = vpop.xlane.xlu0 %643
      %645 = vadd.xlane.f32.xlu0 %v639
      %v646 = vpop.xlane.xlu0 %645
      %647 = vadd.xlane.f32.xlu0 %v640
      %v648 = vpop.xlane.xlu0 %647
      %v649 = vadd.f32 %v633, %v642
      %v650 = vadd.f32 %v634, %v644
      %v651 = vadd.f32 %v635, %v646
      %v652 = vadd.f32 %v636, %v648
      %vm653 = vcmask 15368
      %654 = vst.msk [vmem:[%s310] sm:$0xff] %vm653, %v649
      %655 = vst.msk [vmem:[%s310 + $0x8] sm:$0xff] %vm653, %v650
      %656 = vst.msk [vmem:[%s310 + $0x10] sm:$0xff] %vm653, %v651
      %657 = vst.msk [vmem:[%s310 + $0x18] sm:$0xff] %vm653, %v652
      %v658 = vld [vmem:[%s310 + $0x20] sm:$0xff]
      %v659 = vadd.f32 %v608, %v609
      %v660 = vadd.f32 %v659, %v610
      %v661 = vadd.f32 %v660, %v611
      %662 = vadd.xlane.f32.xlu0 %v661
      %v663 = vpop.xlane.xlu0 %662
      %v664 = vadd.f32 %v658, %v663
      %665 = vst.msk [vmem:[%s310 + $0x20] sm:$0xff] %vm628, %v664
      %v666 = vld [vmem:[%s310 + $0x20] sm:$0xff]
      %v667 = vmul.f32 %v608, %v608
      %v668 = vmul.f32 %v609, %v609
      %v669 = vmul.f32 %v610, %v610
      %v670 = vmul.f32 %v611, %v611
      %v671 = vadd.f32 %v667, %v668
      %v672 = vadd.f32 %v671, %v669
      %v673 = vadd.f32 %v672, %v670
      %674 = vadd.xlane.f32.xlu0 %v673
      %v675 = vpop.xlane.xlu0 %674
      %v676 = vadd.f32 %v666, %v675
      %677 = vst.msk [vmem:[%s310 + $0x20] sm:$0xff] %vm653, %v676
      %p678 = scmp.lt.s32.totalorder %s21, 1
      %s679 = scalar_select %p678, %s21, 1
      %s680 = smul.addr %s679, 5
      %s681 = smul.addr %s680, 8
      %s682 = scalar_lea.vmem %s6, %s681
      // Predicated region
      $region49: #{_lambda_.2} parent=43 // pred_check
        %p683 = pneg %p187
      $region50: #{_lambda_.2} parent=43 // pred_check_branch
        %685 = sbr.rel (%p683) target = $region52
      $region51: #{_lambda_.2} parent=43 // pred_region
        _
      $region52: #{_lambda_.2} parent=43 // pred_fallthru
        _
    $region44: #{_lambda_.2} parent=5 // pred_fallthru
      _
    %p686 = scmp.le.s32.totalorder 2, %s12
    // Predicated region
    $region53: #{_lambda_.2} parent=5 // pred_check
      %p687 = pneg %p686
    $region54: #{_lambda_.2} parent=5 // pred_check_branch
      %689 = sbr.rel (%p687) target = $region56
    $region55: #{_lambda_.2} parent=5 // pred_region
      %s690 = ssub.s32 %s12, 2
      // Predicated region
      $region57: #{_lambda_.2} parent=55 // pred_check
        %p691 = pneg %p193
      $region58: #{_lambda_.2} parent=55 // pred_check_branch
        %693 = sbr.rel (%p691) target = $region60
      $region59: #{_lambda_.2} parent=55 // pred_region
        %p694 = scmp.lt.s32.totalorder %s23, 1
        %s695 = scalar_select %p694, %s23, 1
        %s696 = smul.addr %s695, 5
        %s697 = smul.addr %s696, 8
        %s698 = scalar_lea.vmem %s6, %s697
      $region60: #{_lambda_.2} parent=55 // pred_fallthru
        _
    $region56: #{_lambda_.2} parent=5 // pred_fallthru
      _
  $region6: #{_lambda_.2} parent=0 // loop_footer
    %s16 = sadd.s32 1, %s12
  $region7: #{_lambda_.2} parent=0 // loop_footer_branch
    %11 = sbr.rel target = $region3
  $region8: #{_lambda_.2} parent=0 // loop_exit
    _

// kernel: _lambda_.3
$region0: #{_lambda_.3}
  #allocation0 [shape = 'u32[]', space=smem, size = 0x4, offset = 0x4, fixed_abs, tag = 'smem constant byte address 0x4 - core index']
  #allocation1 [shape = 'u32[144,128]{1,0:T(1,128)}', space=vmem, size = 0x12000, scoped, tag = 'internal scratch']
  %s0 = inlined_call_operand.vmem [shape: f32[2,8,256], index: 0, kind: input, shape index: {}]
  %s1 = inlined_call_operand.vmem [shape: f32[2,8,1024], index: 1, kind: input, shape index: {}]
  %s2 = inlined_call_operand.vmem [shape: f32[32,8], index: 2, kind: input, shape index: {}]
  %s3 = inlined_call_operand.vmem [shape: f32[32,3], index: 3, kind: input, shape index: {}]
  %s4 = inlined_call_operand.vmem [shape: f32[8,8], index: 4, kind: input, shape index: {}]
  %s5 = inlined_call_operand.vmem [shape: f32[8,3], index: 5, kind: input, shape index: {}]
  %s6 = inlined_call_operand.vmem [shape: f32[2,32,256], index: 6, kind: output, shape index: {0}]
  %s7 = inlined_call_operand.vmem [shape: f32[2,16,1024], index: 7, kind: output, shape index: {1}]
  %8 = xla_tuple %s6, %s7
  %s9 = sld [smem:[#allocation0]]
  $region99: #{_lambda_.3} parent=0
    _
  %s11 = ssub.s32 1, %s9
  %s12 = scalar_select 0, %s11, %s9
  $region1: #{_lambda_.3} parent=0
    #allocation2 [shape = 'u8[32768]{0}', space=vmem, size = 0x8000, scoped, tag = 'output window, operand 0']
    loop: start=0, step=1, limit=6
    $region2: #{_lambda_.3} parent=1 // loop_pre_header
      _
    $region3: #{_lambda_.3} parent=1 // loop_header
      %s14 = sphi 0, %s18
      %p15 = scmp.ge.s32.totalorder %s14, 6
      %s21 = sphi 0, %s33
      %s22 = sphi 0, %s29
      %s23 = sphi 0, %s21
      %s24 = sphi 0, %s22
      %s25 = sphi 0, %s23
      %s26 = sphi 0, %s24
      %s38 = sphi 0, %s40
      %s41 = sphi 0, %s38
      %s42 = sphi 0, %s41
      %s58 = sphi 0, %s42
      %s66 = sphi 0, %s68
      %s69 = sphi 0, %s66
      %s70 = sphi 0, %s69
      %s86 = sphi 0, %s70
      %s90 = sphi 0, %s90
      %s92 = sphi 0, %s90
      %s93 = sphi 0, %s92
      %s107 = sphi 0, %s93
      %s111 = sphi 0, %s111
      %s113 = sphi 0, %s111
      %s114 = sphi 0, %s113
      %s128 = sphi 0, %s114
      %s132 = sphi 0, %s132
      %s134 = sphi 0, %s132
      %s135 = sphi 0, %s134
      %s149 = sphi 0, %s135
      %s153 = sphi 0, %s153
      %s155 = sphi 0, %s153
      %s156 = sphi 0, %s155
      %s170 = sphi 0, %s156
      %s178 = sphi 0, %s180
      %s181 = sphi 0, %s178
      %s182 = sphi 0, %s181
      %s198 = sphi 0, %s182
      %s206 = sphi 0, %s208
      %s209 = sphi 0, %s206
      %s210 = sphi 0, %s209
      %s226 = sphi 0, %s210
    $region4: #{_lambda_.3} parent=1 // loop_header_branch
      %17 = sbr.rel (%p15) target = $region8
    $region5: #{_lambda_.3} parent=1 // loop_body
      %s19 = ssub.s32 %s14, 1
      %s20 = ssub.s32 %s14, 2
      %s27 = sadd.s32 1, %s22
      %p28 = scmp.ge.s32.totalorder %s27, 2
      %s29 = scalar_select %p28, 0, %s27
      %s30 = sadd.s32 1, %s21
      %s31 = scalar_select %p28, %s30, %s21
      %p32 = scmp.ge.s32.totalorder %s31, 2
      %s33 = scalar_select %p32, 0, %s31
      %s34 = ssub.s32 %s21, %s33
      %s35 = ssub.s32 %s22, %s29
      %s36 = sor.u32 %s34, %s35
      %p37 = scmp.eq.s32.totalorder %s36, 0
      %s39 = sadd.s32 %s38, 1
      %s40 = scalar_select %p37, %s38, %s39
      %p43 = pneg %p37
      %p44 = scmp.eq.s32.totalorder %s14, 3
      %p45 = por %p43, %p44
      %p46 = scmp.ne.s32.totalorder %s38, %s41
      %p47 = scmp.eq.s32.totalorder %s14, 0
      %p48 = por %p46, %p47
      %p49 = scmp.ne.s32.totalorder %s38, %s41
      %p50 = scmp.eq.s32.totalorder %s19, 3
      %p51 = por %p49, %p50
      %p52 = scmp.ne.s32.totalorder %s41, %s42
      %p53 = scmp.eq.s32.totalorder %s19, 0
      %p54 = por %p52, %p53
      %p55 = scmp.ne.s32.totalorder %s41, %s42
      %p56 = scmp.eq.s32.totalorder %s20, 3
      %p57 = por %p55, %p56
      %p59 = scmp.ne.s32.totalorder %s42, %s58
      %p60 = scmp.eq.s32.totalorder %s20, 0
      %p61 = por %p59, %p60
      %s62 = ssub.s32 %s21, %s33
      %s63 = ssub.s32 %s22, %s29
      %s64 = sor.u32 %s62, %s63
      %p65 = scmp.eq.s32.totalorder %s64, 0
      %s67 = sadd.s32 %s66, 1
      %s68 = scalar_select %p65, %s66, %s67
      %p71 = pneg %p65
      %p72 = scmp.eq.s32.totalorder %s14, 3
      %p73 = por %p71, %p72
      %p74 = scmp.ne.s32.totalorder %s66, %s69
      %p75 = scmp.eq.s32.totalorder %s14, 0
      %p76 = por %p74, %p75
      %p77 = scmp.ne.s32.totalorder %s66, %s69
      %p78 = scmp.eq.s32.totalorder %s19, 3
      %p79 = por %p77, %p78
      %p80 = scmp.ne.s32.totalorder %s69, %s70
      %p81 = scmp.eq.s32.totalorder %s19, 0
      %p82 = por %p80, %p81
      %p83 = scmp.ne.s32.totalorder %s69, %s70
      %p84 = scmp.eq.s32.totalorder %s20, 3
      %p85 = por %p83, %p84
      %p87 = scmp.ne.s32.totalorder %s70, %s86
      %p88 = scmp.eq.s32.totalorder %s20, 0
      %p89 = por %p87, %p88
      %s91 = sadd.s32 %s90, 1
      %p94 = scmp.eq.s32.totalorder %s14, 3
      %p95 = scmp.ne.s32.totalorder %s90, %s92
      %p96 = scmp.eq.s32.totalorder %s14, 0
      %p97 = por %p95, %p96
      %p98 = scmp.ne.s32.totalorder %s90, %s92
      %p99 = scmp.eq.s32.totalorder %s19, 3
      %p100 = por %p98, %p99
      %p101 = scmp.ne.s32.totalorder %s92, %s93
      %p102 = scmp.eq.s32.totalorder %s19, 0
      %p103 = por %p101, %p102
      %p104 = scmp.ne.s32.totalorder %s92, %s93
      %p105 = scmp.eq.s32.totalorder %s20, 3
      %p106 = por %p104, %p105
      %p108 = scmp.ne.s32.totalorder %s93, %s107
      %p109 = scmp.eq.s32.totalorder %s20, 0
      %p110 = por %p108, %p109
      %s112 = sadd.s32 %s111, 1
      %p115 = scmp.eq.s32.totalorder %s14, 3
      %p116 = scmp.ne.s32.totalorder %s111, %s113
      %p117 = scmp.eq.s32.totalorder %s14, 0
      %p118 = por %p116, %p117
      %p119 = scmp.ne.s32.totalorder %s111, %s113
      %p120 = scmp.eq.s32.totalorder %s19, 3
      %p121 = por %p119, %p120
      %p122 = scmp.ne.s32.totalorder %s113, %s114
      %p123 = scmp.eq.s32.totalorder %s19, 0
      %p124 = por %p122, %p123
      %p125 = scmp.ne.s32.totalorder %s113, %s114
      %p126 = scmp.eq.s32.totalorder %s20, 3
      %p127 = por %p125, %p126
      %p129 = scmp.ne.s32.totalorder %s114, %s128
      %p130 = scmp.eq.s32.totalorder %s20, 0
      %p131 = por %p129, %p130
      %s133 = sadd.s32 %s132, 1
      %p136 = scmp.eq.s32.totalorder %s14, 3
      %p137 = scmp.ne.s32.totalorder %s132, %s134
      %p138 = scmp.eq.s32.totalorder %s14, 0
      %p139 = por %p137, %p138
      %p140 = scmp.ne.s32.totalorder %s132, %s134
      %p141 = scmp.eq.s32.totalorder %s19, 3
      %p142 = por %p140, %p141
      %p143 = scmp.ne.s32.totalorder %s134, %s135
      %p144 = scmp.eq.s32.totalorder %s19, 0
      %p145 = por %p143, %p144
      %p146 = scmp.ne.s32.totalorder %s134, %s135
      %p147 = scmp.eq.s32.totalorder %s20, 3
      %p148 = por %p146, %p147
      %p150 = scmp.ne.s32.totalorder %s135, %s149
      %p151 = scmp.eq.s32.totalorder %s20, 0
      %p152 = por %p150, %p151
      %s154 = sadd.s32 %s153, 1
      %p157 = scmp.eq.s32.totalorder %s14, 3
      %p158 = scmp.ne.s32.totalorder %s153, %s155
      %p159 = scmp.eq.s32.totalorder %s14, 0
      %p160 = por %p158, %p159
      %p161 = scmp.ne.s32.totalorder %s153, %s155
      %p162 = scmp.eq.s32.totalorder %s19, 3
      %p163 = por %p161, %p162
      %p164 = scmp.ne.s32.totalorder %s155, %s156
      %p165 = scmp.eq.s32.totalorder %s19, 0
      %p166 = por %p164, %p165
      %p167 = scmp.ne.s32.totalorder %s155, %s156
      %p168 = scmp.eq.s32.totalorder %s20, 3
      %p169 = por %p167, %p168
      %p171 = scmp.ne.s32.totalorder %s156, %s170
      %p172 = scmp.eq.s32.totalorder %s20, 0
      %p173 = por %p171, %p172
      %s174 = ssub.s32 %s21, %s33
      %s175 = ssub.s32 %s22, %s29
      %s176 = sor.u32 %s174, %s175
      %p177 = scmp.eq.s32.totalorder %s176, 0
      %s179 = sadd.s32 %s178, 1
      %s180 = scalar_select %p177, %s178, %s179
      %p183 = pneg %p177
      %p184 = scmp.eq.s32.totalorder %s14, 3
      %p185 = por %p183, %p184
      %p186 = scmp.ne.s32.totalorder %s178, %s181
      %p187 = scmp.eq.s32.totalorder %s14, 0
      %p188 = por %p186, %p187
      %p189 = scmp.ne.s32.totalorder %s178, %s181
      %p190 = scmp.eq.s32.totalorder %s19, 3
      %p191 = por %p189, %p190
      %p192 = scmp.ne.s32.totalorder %s181, %s182
      %p193 = scmp.eq.s32.totalorder %s19, 0
      %p194 = por %p192, %p193
      %p195 = scmp.ne.s32.totalorder %s181, %s182
      %p196 = scmp.eq.s32.totalorder %s20, 3
      %p197 = por %p195, %p196
      %p199 = scmp.ne.s32.totalorder %s182, %s198
      %p200 = scmp.eq.s32.totalorder %s20, 0
      %p201 = por %p199, %p200
      %s202 = ssub.s32 %s21, %s33
      %s203 = ssub.s32 %s22, %s29
      %s204 = sor.u32 %s202, %s203
      %p205 = scmp.eq.s32.totalorder %s204, 0
      %s207 = sadd.s32 %s206, 1
      %s208 = scalar_select %p205, %s206, %s207
      %p211 = pneg %p205
      %p212 = scmp.eq.s32.totalorder %s14, 3
      %p213 = por %p211, %p212
      %p214 = scmp.ne.s32.totalorder %s206, %s209
      %p215 = scmp.eq.s32.totalorder %s14, 0
      %p216 = por %p214, %p215
      %p217 = scmp.ne.s32.totalorder %s206, %s209
      %p218 = scmp.eq.s32.totalorder %s19, 3
      %p219 = por %p217, %p218
      %p220 = scmp.ne.s32.totalorder %s209, %s210
      %p221 = scmp.eq.s32.totalorder %s19, 0
      %p222 = por %p220, %p221
      %p223 = scmp.ne.s32.totalorder %s209, %s210
      %p224 = scmp.eq.s32.totalorder %s20, 3
      %p225 = por %p223, %p224
      %p227 = scmp.ne.s32.totalorder %s210, %s226
      %p228 = scmp.eq.s32.totalorder %s20, 0
      %p229 = por %p227, %p228
      %p230 = scmp.le.s32.totalorder 1, %s14
      %p231 = scmp.lt.s32.totalorder %s14, 5
      %p232 = pnand %p230, %p231
      %p233 = pneg %p232
      // Predicated region
      $region9: #{_lambda_.3} parent=5 // pred_check
        _
      $region10: #{_lambda_.3} parent=5 // pred_check_branch
        %235 = sbr.rel (%p232) target = $region12
      $region11: #{_lambda_.3} parent=5 // pred_region
        %s236 = ssub.s32 %s14, 1
        // Predicated region
        $region13: #{_lambda_.3} parent=11 // pred_check
          %p237 = pneg %p103
        $region14: #{_lambda_.3} parent=11 // pred_check_branch
          %239 = sbr.rel (%p237) target = $region16
        $region15: #{_lambda_.3} parent=11 // pred_region
          _
        $region16: #{_lambda_.3} parent=11 // pred_fallthru
          _
        // Predicated region
        $region17: #{_lambda_.3} parent=11 // pred_check
          %p240 = pneg %p124
        $region18: #{_lambda_.3} parent=11 // pred_check_branch
          %242 = sbr.rel (%p240) target = $region20
        $region19: #{_lambda_.3} parent=11 // pred_region
          _
        $region20: #{_lambda_.3} parent=11 // pred_fallthru
          _
        // Predicated region
        $region21: #{_lambda_.3} parent=11 // pred_check
          %p243 = pneg %p145
        $region22: #{_lambda_.3} parent=11 // pred_check_branch
          %245 = sbr.rel (%p243) target = $region24
        $region23: #{_lambda_.3} parent=11 // pred_region
          _
        $region24: #{_lambda_.3} parent=11 // pred_fallthru
          _
        // Predicated region
        $region25: #{_lambda_.3} parent=11 // pred_check
          %p246 = pneg %p166
        $region26: #{_lambda_.3} parent=11 // pred_check_branch
          %248 = sbr.rel (%p246) target = $region28
        $region27: #{_lambda_.3} parent=11 // pred_region
          _
        $region28: #{_lambda_.3} parent=11 // pred_fallthru
          _
      $region12: #{_lambda_.3} parent=5 // pred_fallthru
        _
      %p249 = scmp.lt.s32.totalorder %s14, 4
      // Predicated region
      $region29: #{_lambda_.3} parent=5 // pred_check
        %p250 = pneg %p249
      $region30: #{_lambda_.3} parent=5 // pred_check_branch
        %252 = sbr.rel (%p250) target = $region32
      $region31: #{_lambda_.3} parent=5 // pred_region
        // Predicated region
        $region33: #{_lambda_.3} parent=31 // pred_check
          %p253 = pneg %p48
        $region34: #{_lambda_.3} parent=31 // pred_check_branch
          %255 = sbr.rel (%p253) target = $region36
        $region35: #{_lambda_.3} parent=31 // pred_region
          %p256 = scmp.lt.s32.totalorder %s21, 1
          %s257 = scalar_select %p256, %s21, 1
          %p258 = scmp.lt.s32.totalorder %s22, 1
          %s259 = scalar_select %p258, %s22, 1
          %s260 = smul.addr %s257, 2
          %s261 = sadd.s32 %s259, %s260
          %s262 = smul.addr %s261, 8
          %s263 = scalar_lea.vmem %s0, %s262
        $region36: #{_lambda_.3} parent=31 // pred_fallthru
          _
        // Predicated region
        $region37: #{_lambda_.3} parent=31 // pred_check
          %p264 = pneg %p76
        $region38: #{_lambda_.3} parent=31 // pred_check_branch
          %266 = sbr.rel (%p264) target = $region40
        $region39: #{_lambda_.3} parent=31 // pred_region
          %s267 = smul.u32 4, %s22
          %p268 = scmp.lt.s32.totalorder %s21, 1
          %s269 = scalar_select %p268, %s21, 1
          %p270 = scmp.lt.s32.totalorder %s267, 7
          %s271 = scalar_select %p270, %s267, 7
          %s272 = smul.addr %s269, 8
          %s273 = sadd.s32 %s271, %s272
          %s274 = smul.addr %s273, 8
          %s275 = scalar_lea.vmem %s1, %s274
          %s276 = smul.u32 4, %s22
        $region40: #{_lambda_.3} parent=31 // pred_fallthru
          _
      $region32: #{_lambda_.3} parent=5 // pred_fallthru
        _
      %p277 = scmp.le.s32.totalorder 1, %s14
      %p278 = scmp.lt.s32.totalorder %s14, 5
      %p279 = pnand %p277, %p278
      %p280 = pneg %p279
      // Predicated region
      $region41: #{_lambda_.3} parent=5 // pred_check
        _
      $region42: #{_lambda_.3} parent=5 // pred_check_branch
        %282 = sbr.rel (%p279) target = $region44
      $region43: #{_lambda_.3} parent=5 // pred_region
        %s283 = ssub.s32 %s14, 1
        %p284 = scmp.lt.s32.totalorder %s23, 1
        %s285 = scalar_select %p284, %s23, 1
        %p286 = scmp.lt.s32.totalorder %s24, 1
        %s287 = scalar_select %p286, %s24, 1
        %s288 = smul.addr %s285, 2
        %s289 = sadd.s32 %s287, %s288
        %s290 = smul.addr %s289, 8
        %s291 = scalar_lea.vmem %s0, %s290
        %p292 = pneg %p54
        %p293 = pneg %p51
        %s294 = smul.u32 4, %s24
        %p295 = scmp.lt.s32.totalorder %s23, 1
        %s296 = scalar_select %p295, %s23, 1
        %p297 = scmp.lt.s32.totalorder %s294, 7
        %s298 = scalar_select %p297, %s294, 7
        %s299 = smul.addr %s296, 8
        %s300 = sadd.s32 %s298, %s299
        %s301 = smul.addr %s300, 8
        %s302 = scalar_lea.vmem %s1, %s301
        %p303 = pneg %p82
        %p304 = pneg %p79
        %p305 = pneg %p103
        %p306 = pneg %p100
        %p307 = pneg %p124
        %p308 = pneg %p121
        %p309 = pneg %p145
        %p310 = pneg %p142
        %p311 = pneg %p166
        %p312 = pneg %p163
        %p313 = pneg %p194
        %p314 = pneg %p191
        %s315 = sand.u32 %s181, 1
        %s316 = sand.u32 %s181, 1
        %s317 = smul.addr %s316, 32
        %s318 = scalar_lea.vmem [#allocation2], %s317
        %p319 = pneg %p222
        %p320 = pneg %p219
        %s321 = smul.u32 4, %s24
        %p322 = scmp.lt.s32.totalorder %s23, 1
        %s323 = scalar_select %p322, %s23, 1
        %p324 = scmp.lt.s32.totalorder %s321, 7
        %s325 = scalar_select %p324, %s321, 7
        %s326 = sadd.s32 %s325, 8
        %s327 = smul.addr %s323, 16
        %s328 = sadd.s32 %s326, %s327
        %s329 = smul.addr %s328, 8
        %s330 = scalar_lea.vmem %s7, %s329
        %p331 = scmp.lt.s32.totalorder %s23, 1
        %s332 = scalar_select %p331, %s23, 1
        %p333 = scmp.lt.s32.totalorder %s24, 1
        %s334 = scalar_select %p333, %s24, 1
        %s335 = smul.addr %s332, 2
        %s336 = sadd.s32 %s334, %s335
        %s337 = smul.addr %s336, 8
        %s338 = scalar_lea.vmem %s0, %s337
        %s339 = smul.u32 4, %s24
        %p340 = scmp.lt.s32.totalorder %s23, 1
        %s341 = scalar_select %p340, %s23, 1
        %p342 = scmp.lt.s32.totalorder %s339, 7
        %s343 = scalar_select %p342, %s339, 7
        %s344 = smul.addr %s341, 8
        %s345 = sadd.s32 %s343, %s344
        %s346 = smul.addr %s345, 8
        %s347 = scalar_lea.vmem %s1, %s346
        %s348 = smul.u32 4, %s24
        %s349 = smul.u32 4, %s24
        %p350 = scmp.lt.s32.totalorder %s23, 1
        %s351 = scalar_select %p350, %s23, 1
        %p352 = scmp.lt.s32.totalorder %s349, 7
        %s353 = scalar_select %p352, %s349, 7
        %s354 = sadd.s32 %s353, 8
        %s355 = smul.addr %s351, 16
        %s356 = sadd.s32 %s354, %s355
        %s357 = smul.addr %s356, 8
        %s358 = scalar_lea.vmem %s7, %s357
        %s359 = smul.u32 4, %s24
        %v360 = vld [vmem:[%s2] sm:$0xff]
        %v361 = vld [vmem:[%s2 + $0x8] sm:$0xff]
        %v362 = vld [vmem:[%s2 + $0x10] sm:$0xff]
        %v363 = vld [vmem:[%s2 + $0x18] sm:$0xff]
        %v364 = vld [vmem:[%s338] sm:$0xff]
        %v365 = vld [vmem:[%s3] sm:$0xff]
        %v366 = vld [vmem:[%s3 + $0x8] sm:$0xff]
        %v367 = vld [vmem:[%s3 + $0x10] sm:$0xff]
        %v368 = vld [vmem:[%s3 + $0x18] sm:$0xff]
        %370 = vset.pattern.permute.xlu0 0
        %371 = vperm.xlu0 %370, %v365
        %v372 = vpop.permute.xlu0 %371
        %375 = vset.pattern.permute.xlu0 0
        %376 = vperm.xlu0 %375, %v366
        %v377 = vpop.permute.xlu0 %376
        %380 = vset.pattern.permute.xlu0 0
        %381 = vperm.xlu0 %380, %v367
        %v382 = vpop.permute.xlu0 %381
        %385 = vset.pattern.permute.xlu0 0
        %386 = vperm.xlu0 %385, %v368
        %v387 = vpop.permute.xlu0 %386
        %vm389 = vcmask 64512
        %v391 = vsel %vm389, %v360, 0
        %v394 = vsel %vm389, %v361, 0
        %v397 = vsel %vm389, %v362, 0
        %v400 = vsel %vm389, %v363, 0
        %402 = vmatprep.subr.mxu0 0.0
        %403 = vmatpush1.msra.mxu0 %v364
        %404 = vmatprep.subr.mxu0 0.0
        %405 = vmatpush1.msra.mxu0 0.0
        %406 = vmatprep.subr.mxu0 0.0
        %407 = vmatpush1.msra.mxu0 0.0
        %408 = vmatprep.subr.mxu0 0.0
        %409 = vmatpush1.msra.mxu0 0.0
        %410 = vmatprep.subr.mxu0 0.0
        %411 = vmatpush1.msra.mxu0 0.0
        %412 = vmatprep.subr.mxu0 0.0
        %413 = vmatpush1.msra.mxu0 0.0
        %414 = vmatprep.subr.mxu0 0.0
        %415 = vmatpush1.msra.mxu0 0.0
        %416 = vmatprep.subr.mxu0 0.0
        %417 = vmatpush1.msra.mxu0 0.0
        %418 = vmatprep.subr.mxu0 0.0
        %419 = vmatpush1.msra.mxu0 0.0
        %420 = vmatprep.subr.mxu0 0.0
        %421 = vmatpush1.msra.mxu0 0.0
        %422 = vmatprep.subr.mxu0 0.0
        %423 = vmatpush1.msra.mxu0 0.0
        %424 = vmatprep.subr.mxu0 0.0
        %425 = vmatpush1.msra.mxu0 0.0
        %426 = vmatprep.subr.mxu0 0.0
        %427 = vmatpush1.msra.mxu0 0.0
        %428 = vmatprep.subr.mxu0 0.0
        %429 = vmatpush1.msra.mxu0 0.0
        %430 = vmatprep.subr.mxu0 0.0
        %431 = vmatpush1.msra.mxu0 0.0
        %432 = vmatprep.subr.mxu0 0.0
        %433 = vmatpush1.msra.mxu0 0.0
        %434 = vmatprep.subr.mxu0 0.0
        %435 = vmatpush1.msra.mxu0 0.0
        %436 = vmatprep.subr.mxu0 0.0
        %437 = vmatpush1.msra.mxu0 0.0
        %438 = vmatprep.subr.mxu0 0.0
        %439 = vmatpush1.msra.mxu0 0.0
        %440 = vmatprep.subr.mxu0 0.0
        %441 = vmatpush1.msra.mxu0 0.0
        %442 = vmatprep.subr.mxu0 0.0
        %443 = vmatpush1.msra.mxu0 0.0
        %444 = vmatprep.subr.mxu0 0.0
        %445 = vmatpush1.msra.mxu0 0.0
        %446 = vmatprep.subr.mxu0 0.0
        %447 = vmatpush1.msra.mxu0 0.0
        %448 = vmatprep.subr.mxu0 0.0
        %449 = vmatpush1.msra.mxu0 0.0
        %450 = vmatprep.subr.mxu0 0.0
        %451 = vmatpush1.msra.mxu0 0.0
        %452 = vmatprep.subr.mxu0 0.0
        %453 = vmatpush1.msra.mxu0 0.0
        %454 = vmatprep.subr.mxu0 0.0
        %455 = vmatpush1.msra.mxu0 0.0
        %456 = vmatprep.subr.mxu0 0.0
        %457 = vmatpush1.msra.mxu0 0.0
        %458 = vmatprep.subr.mxu0 0.0
        %459 = vmatpush1.msra.mxu0 0.0
        %460 = vmatprep.subr.mxu0 0.0
        %461 = vmatpush1.msra.mxu0 0.0
        %462 = vmatprep.subr.mxu0 0.0
        %463 = vmatpush1.msra.mxu0 0.0
        %464 = vmatprep.subr.mxu0 0.0
        %465 = vmatpush1.msra.mxu0 0.0
        %466 = vmatprep.mubr.f32.mxu0 0.0
        %467 = vmatmul.mubr.f32.gmra.mrb[0].mxu0 %v391
        %v468 = vpop.f32.mrb[0].mxu0
        %v469 = vadd.f32 %v372, %v468
        %v470 = vpop.f32.mrb[0].mxu0
        %471 = vmatprep.mubr.f32.mxu0 0.0
        %472 = vmatmul.mubr.f32.gmra.mrb[0].mxu0 %v394
        %v473 = vpop.f32.mrb[0].mxu0
        %v474 = vadd.f32 %v377, %v473
        %v475 = vpop.f32.mrb[0].mxu0
        %476 = vmatprep.mubr.f32.mxu0 0.0
        %477 = vmatmul.mubr.f32.gmra.mrb[0].mxu0 %v397
        %v478 = vpop.f32.mrb[0].mxu0
        %v479 = vadd.f32 %v382, %v478
        %v480 = vpop.f32.mrb[0].mxu0
        %481 = vmatprep.mubr.f32.mxu0 0.0
        %482 = vmatmul.mubr.f32.gmra.mrb[0].mxu0 %v400
        %v483 = vpop.f32.mrb[0].mxu0
        %v484 = vadd.f32 %v387, %v483
        %v485 = vpop.f32.mrb[0].mxu0
        %486 = vdwg.mxu0
        %v487 = vmax.f32 %v469, 0.0
        %v488 = vmax.f32 %v474, 0.0
        %v489 = vmax.f32 %v479, 0.0
        %v490 = vmax.f32 %v484, 0.0
        %491 = vset.pattern.permute.xlu0 1
        %492 = vperm.xlu0 %491, %v365
        %v493 = vpop.permute.xlu0 %492
        %495 = vset.pattern.permute.xlu0 1
        %496 = vperm.xlu0 %495, %v366
        %v497 = vpop.permute.xlu0 %496
        %499 = vset.pattern.permute.xlu0 1
        %500 = vperm.xlu0 %499, %v367
        %v501 = vpop.permute.xlu0 %500
        %503 = vset.pattern.permute.xlu0 1
        %504 = vperm.xlu0 %503, %v368
        %v505 = vpop.permute.xlu0 %504
        %v507 = vmul.f32 %v487, %v493
        %v508 = vmul.f32 %v488, %v497
        %v509 = vmul.f32 %v489, %v501
        %v510 = vmul.f32 %v490, %v505
        %511 = vset.pattern.permute.xlu0 2
        %512 = vperm.xlu0 %511, %v365
        %v513 = vpop.permute.xlu0 %512
        %515 = vset.pattern.permute.xlu0 2
        %516 = vperm.xlu0 %515, %v366
        %v517 = vpop.permute.xlu0 %516
        %519 = vset.pattern.permute.xlu0 2
        %520 = vperm.xlu0 %519, %v367
        %v521 = vpop.permute.xlu0 %520
        %523 = vset.pattern.permute.xlu0 2
        %524 = vperm.xlu0 %523, %v368
        %v525 = vpop.permute.xlu0 %524
        %v527 = vadd.f32 %v507, %v513
        %v528 = vadd.f32 %v508, %v517
        %v529 = vadd.f32 %v509, %v521
        %v530 = vadd.f32 %v510, %v525
        %531 = vst [vmem:[%s318] sm:$0xff] %v527
        %532 = vst [vmem:[%s318 + $0x8] sm:$0xff] %v528
        %533 = vst [vmem:[%s318 + $0x10] sm:$0xff] %v529
        %534 = vst [vmem:[%s318 + $0x18] sm:$0xff] %v530
        %v535 = vld [vmem:[%s4] sm:$0xff]
        %v536 = vld [vmem:[%s347] sm:$0xff]
        %v537 = vld [vmem:[%s347 + $0x8] sm:$0xff]
        %v538 = vld [vmem:[%s347 + $0x10] sm:$0xff]
        %v539 = vld [vmem:[%s347 + $0x18] sm:$0xff]
        %v540 = vld [vmem:[%s5] sm:$0xff]
        %542 = vset.pattern.permute.xlu0 0
        %543 = vperm.xlu0 %542, %v540
        %v544 = vpop.permute.xlu0 %543
        %v547 = vsel %vm389, %v535, 0
        %549 = vmatprep.subr.mxu0 %v537
        %550 = vmatpush1.msra.mxu0 %v536
        %551 = vmatprep.subr.mxu0 0.0
        %552 = vmatpush1.msra.mxu0 0.0
        %553 = vmatprep.subr.mxu0 0.0
        %554 = vmatpush1.msra.mxu0 0.0
        %555 = vmatprep.subr.mxu0 0.0
        %556 = vmatpush1.msra.mxu0 0.0
        %557 = vmatprep.subr.mxu0 0.0
        %558 = vmatpush1.msra.mxu0 0.0
        %559 = vmatprep.subr.mxu0 0.0
        %560 = vmatpush1.msra.mxu0 0.0
        %561 = vmatprep.subr.mxu0 0.0
        %562 = vmatpush1.msra.mxu0 0.0
        %563 = vmatprep.subr.mxu0 0.0
        %564 = vmatpush1.msra.mxu0 0.0
        %565 = vmatprep.subr.mxu0 0.0
        %566 = vmatpush1.msra.mxu0 0.0
        %567 = vmatprep.subr.mxu0 0.0
        %568 = vmatpush1.msra.mxu0 0.0
        %569 = vmatprep.subr.mxu0 0.0
        %570 = vmatpush1.msra.mxu0 0.0
        %571 = vmatprep.subr.mxu0 0.0
        %572 = vmatpush1.msra.mxu0 0.0
        %573 = vmatprep.subr.mxu0 0.0
        %574 = vmatpush1.msra.mxu0 0.0
        %575 = vmatprep.subr.mxu0 0.0
        %576 = vmatpush1.msra.mxu0 0.0
        %577 = vmatprep.subr.mxu0 0.0
        %578 = vmatpush1.msra.mxu0 0.0
        %579 = vmatprep.subr.mxu0 0.0
        %580 = vmatpush1.msra.mxu0 0.0
        %581 = vmatprep.subr.mxu0 0.0
        %582 = vmatpush1.msra.mxu0 0.0
        %583 = vmatprep.subr.mxu0 0.0
        %584 = vmatpush1.msra.mxu0 0.0
        %585 = vmatprep.subr.mxu0 0.0
        %586 = vmatpush1.msra.mxu0 0.0
        %587 = vmatprep.subr.mxu0 0.0
        %588 = vmatpush1.msra.mxu0 0.0
        %589 = vmatprep.subr.mxu0 0.0
        %590 = vmatpush1.msra.mxu0 0.0
        %591 = vmatprep.subr.mxu0 0.0
        %592 = vmatpush1.msra.mxu0 0.0
        %593 = vmatprep.subr.mxu0 0.0
        %594 = vmatpush1.msra.mxu0 0.0
        %595 = vmatprep.subr.mxu0 0.0
        %596 = vmatpush1.msra.mxu0 0.0
        %597 = vmatprep.subr.mxu0 0.0
        %598 = vmatpush1.msra.mxu0 0.0
        %599 = vmatprep.subr.mxu0 0.0
        %600 = vmatpush1.msra.mxu0 0.0
        %601 = vmatprep.subr.mxu0 0.0
        %602 = vmatpush1.msra.mxu0 0.0
        %603 = vmatprep.subr.mxu0 0.0
        %604 = vmatpush1.msra.mxu0 0.0
        %605 = vmatprep.subr.mxu0 0.0
        %606 = vmatpush1.msra.mxu0 0.0
        %607 = vmatprep.subr.mxu0 0.0
        %608 = vmatpush1.msra.mxu0 0.0
        %609 = vmatprep.subr.mxu0 0.0
        %610 = vmatpush1.msra.mxu0 0.0
        %611 = vmatprep.subr.mxu0 0.0
        %612 = vmatpush1.msra.mxu0 0.0
        %613 = vmatprep.mubr.f32.mxu0 0.0
        %614 = vmatmul.mubr.f32.gmra.mrb[0].mxu0 %v547
        %v615 = vpop.f32.mrb[0].mxu0
        %v616 = vadd.f32 %v544, %v615
        %v617 = vpop.f32.mrb[0].mxu0
        %v618 = vadd.f32 %v544, %v617
        %619 = vdwg.mxu0
        %620 = vmatprep.subr.mxu0 %v539
        %621 = vmatpush1.msra.mxu0 %v538
        %622 = vmatprep.subr.mxu0 0.0
        %623 = vmatpush1.msra.mxu0 0.0
        %624 = vmatprep.subr.mxu0 0.0
        %625 = vmatpush1.msra.mxu0 0.0
        %626 = vmatprep.subr.mxu0 0.0
        %627 = vmatpush1.msra.mxu0 0.0
        %628 = vmatprep.subr.mxu0 0.0
        %629 = vmatpush1.msra.mxu0 0.0
        %630 = vmatprep.subr.mxu0 0.0
        %631 = vmatpush1.msra.mxu0 0.0
        %632 = vmatprep.subr.mxu0 0.0
        %633 = vmatpush1.msra.mxu0 0.0
        %634 = vmatprep.subr.mxu0 0.0
        %635 = vmatpush1.msra.mxu0 0.0
        %636 = vmatprep.subr.mxu0 0.0
        %637 = vmatpush1.msra.mxu0 0.0
        %638 = vmatprep.subr.mxu0 0.0
        %639 = vmatpush1.msra.mxu0 0.0
        %640 = vmatprep.subr.mxu0 0.0
        %641 = vmatpush1.msra.mxu0 0.0
        %642 = vmatprep.subr.mxu0 0.0
        %643 = vmatpush1.msra.mxu0 0.0
        %644 = vmatprep.subr.mxu0 0.0
        %645 = vmatpush1.msra.mxu0 0.0
        %646 = vmatprep.subr.mxu0 0.0
        %647 = vmatpush1.msra.mxu0 0.0
        %648 = vmatprep.subr.mxu0 0.0
        %649 = vmatpush1.msra.mxu0 0.0
        %650 = vmatprep.subr.mxu0 0.0
        %651 = vmatpush1.msra.mxu0 0.0
        %652 = vmatprep.subr.mxu0 0.0
        %653 = vmatpush1.msra.mxu0 0.0
        %654 = vmatprep.subr.mxu0 0.0
        %655 = vmatpush1.msra.mxu0 0.0
        %656 = vmatprep.subr.mxu0 0.0
        %657 = vmatpush1.msra.mxu0 0.0
        %658 = vmatprep.subr.mxu0 0.0
        %659 = vmatpush1.msra.mxu0 0.0
        %660 = vmatprep.subr.mxu0 0.0
        %661 = vmatpush1.msra.mxu0 0.0
        %662 = vmatprep.subr.mxu0 0.0
        %663 = vmatpush1.msra.mxu0 0.0
        %664 = vmatprep.subr.mxu0 0.0
        %665 = vmatpush1.msra.mxu0 0.0
        %666 = vmatprep.subr.mxu0 0.0
        %667 = vmatpush1.msra.mxu0 0.0
        %668 = vmatprep.subr.mxu0 0.0
        %669 = vmatpush1.msra.mxu0 0.0
        %670 = vmatprep.subr.mxu0 0.0
        %671 = vmatpush1.msra.mxu0 0.0
        %672 = vmatprep.subr.mxu0 0.0
        %673 = vmatpush1.msra.mxu0 0.0
        %674 = vmatprep.subr.mxu0 0.0
        %675 = vmatpush1.msra.mxu0 0.0
        %676 = vmatprep.subr.mxu0 0.0
        %677 = vmatpush1.msra.mxu0 0.0
        %678 = vmatprep.subr.mxu0 0.0
        %679 = vmatpush1.msra.mxu0 0.0
        %680 = vmatprep.subr.mxu0 0.0
        %681 = vmatpush1.msra.mxu0 0.0
        %682 = vmatprep.subr.mxu0 0.0
        %683 = vmatpush1.msra.mxu0 0.0
        %684 = vmatprep.mubr.f32.mxu0 0.0
        %685 = vmatmul.mubr.f32.gmra.mrb[0].mxu0 %v547
        %v686 = vpop.f32.mrb[0].mxu0
        %v687 = vadd.f32 %v544, %v686
        %v688 = vpop.f32.mrb[0].mxu0
        %v689 = vadd.f32 %v544, %v688
        %690 = vdwg.mxu0
        %v691 = vmax.f32 %v616, 0.0
        %v692 = vmax.f32 %v618, 0.0
        %v693 = vmax.f32 %v687, 0.0
        %v694 = vmax.f32 %v689, 0.0
        %695 = vset.pattern.permute.xlu0 1
        %696 = vperm.xlu0 %695, %v540
        %v697 = vpop.permute.xlu0 %696
        %v699 = vmul.f32 %v691, %v697
        %v700 = vmul.f32 %v692, %v697
        %v701 = vmul.f32 %v693, %v697
        %v702 = vmul.f32 %v694, %v697
        %703 = vset.pattern.permute.xlu0 2
        %704 = vperm.xlu0 %703, %v540
        %v705 = vpop.permute.xlu0 %704
        %v707 = vadd.f32 %v699, %v705
        %v708 = vadd.f32 %v700, %v705
        %v709 = vadd.f32 %v701, %v705
        %v710 = vadd.f32 %v702, %v705
        %711 = vst [vmem:[%s358] sm:$0xff] %v707
        %712 = vst [vmem:[%s358 + $0x8] sm:$0xff] %v708
        %713 = vst [vmem:[%s358 + $0x10] sm:$0xff] %v709
        %714 = vst [vmem:[%s358 + $0x18] sm:$0xff] %v710
        %s715 = sand.u32 %s181, 1
        %s716 = sand.u32 %s181, 1
        %s717 = smul.addr %s716, 32
        %s718 = scalar_lea.vmem [#allocation2], %s717
        %s719 = smul.u32 4, %s24
        %p720 = scmp.lt.s32.totalorder %s23, 1
        %s721 = scalar_select %p720, %s23, 1
        %p722 = scmp.lt.s32.totalorder %s719, 7
        %s723 = scalar_select %p722, %s719, 7
        %s724 = sadd.s32 %s723, 8
        %s725 = smul.addr %s721, 16
        %s726 = sadd.s32 %s724, %s725
        %s727 = smul.addr %s726, 8
        %s728 = scalar_lea.vmem %s7, %s727
        // Predicated region
        $region45: #{_lambda_.3} parent=43 // pred_check
          %p729 = pneg %p191
        $region46: #{_lambda_.3} parent=43 // pred_check_branch
          %731 = sbr.rel (%p729) target = $region48
        $region47: #{_lambda_.3} parent=43 // pred_region
          %s732 = smul.addr %s23, 8
          %s733 = sadd.s32 %s24, %s732
          %s734 = smul.addr %s733, 8
          %s735 = scalar_lea.vmem %s6, %s734
          // Predicated region
          $region49: #{_lambda_.3} parent=47 // pred_check
            _
          $region50: #{_lambda_.3} parent=47 // pred_check_branch
            %737 = sbr.rel (0) target = $region52
          $region51: #{_lambda_.3} parent=47 // pred_region
            // Predicated region
            $region53: #{_lambda_.3} parent=51 // pred_check
              _
            $region54: #{_lambda_.3} parent=51 // pred_check_branch
              %739 = sbr.rel (0) target = $region56
            $region55: #{_lambda_.3} parent=51 // pred_region
              // Predicated region
              $region68: #{_lambda_.3} parent=55 // pred_check
                _
              $region69: #{_lambda_.3} parent=55 // pred_check_branch
                %760 = sbr.rel (0) target = $region71
              $region70: #{_lambda_.3} parent=55 // pred_region
                loop: start=0, step=1, limit=1
                $region72: #{_lambda_.3} parent=70 // loop_pre_header
                  _
                $region73: #{_lambda_.3} parent=70 // loop_header
                  %s762 = sphi 0, %s766
                  %p763 = scmp.ge.s32.totalorder %s762, 1
                  %s767 = sphi %s718, %s718
                  %s768 = sphi %s735, %s735
                $region74: #{_lambda_.3} parent=70 // loop_header_branch
                  %765 = sbr.rel (%p763) target = $region78
                $region75: #{_lambda_.3} parent=70 // loop_body
                  %v769 = vld [vmem:[%s767] sm:$0xff]
                  %770 = vst [vmem:[%s768] sm:$0xff] %v769
                  %v771 = vld [vmem:[%s767 + $0x8] sm:$0xff]
                  %772 = vst [vmem:[%s768 + $0x10] sm:$0xff] %v771
                  %v773 = vld [vmem:[%s767 + $0x10] sm:$0xff]
                  %774 = vst [vmem:[%s768 + $0x20] sm:$0xff] %v773
                  %v775 = vld [vmem:[%s767 + $0x18] sm:$0xff]
                  %776 = vst [vmem:[%s768 + $0x30] sm:$0xff] %v775
                $region76: #{_lambda_.3} parent=70 // loop_footer
                  %s766 = sadd.s32 1, %s762
                $region77: #{_lambda_.3} parent=70 // loop_footer_branch
                  %761 = sbr.rel target = $region73
                $region78: #{_lambda_.3} parent=70 // loop_exit
                  _
              $region71: #{_lambda_.3} parent=55 // pred_fallthru
                _
              // Predicated region
              $region79: #{_lambda_.3} parent=55 // pred_check
                _
              $region80: #{_lambda_.3} parent=55 // pred_check_branch
                %778 = sbr.rel target = $region82
              $region81: #{_lambda_.3} parent=55 // pred_region
                _
              $region82: #{_lambda_.3} parent=55 // pred_fallthru
                _
            $region56: #{_lambda_.3} parent=51 // pred_fallthru
              _
            // Predicated region
            $region57: #{_lambda_.3} parent=51 // pred_check
              _
            $region58: #{_lambda_.3} parent=51 // pred_check_branch
              %741 = sbr.rel target = $region60
            $region59: #{_lambda_.3} parent=51 // pred_region
              loop: start=0, step=1, limit=1
              $region61: #{_lambda_.3} parent=59 // loop_pre_header
                _
              $region62: #{_lambda_.3} parent=59 // loop_header
                %s744 = sphi 0, %s748
                %p745 = scmp.ge.s32.totalorder %s744, 1
                %s749 = sphi %s718, %s718
                %s750 = sphi %s735, %s735
              $region63: #{_lambda_.3} parent=59 // loop_header_branch
                %747 = sbr.rel (%p745) target = $region67
              $region64: #{_lambda_.3} parent=59 // loop_body
                %v751 = vld [vmem:[%s749] sm:$0xff]
                %752 = vst [vmem:[%s750] sm:$0xff] %v751
                %v753 = vld [vmem:[%s749 + $0x8] sm:$0xff]
                %754 = vst [vmem:[%s750 + $0x10] sm:$0xff] %v753
                %v755 = vld [vmem:[%s749 + $0x10] sm:$0xff]
                %756 = vst [vmem:[%s750 + $0x20] sm:$0xff] %v755
                %v757 = vld [vmem:[%s749 + $0x18] sm:$0xff]
                %758 = vst [vmem:[%s750 + $0x30] sm:$0xff] %v757
              $region65: #{_lambda_.3} parent=59 // loop_footer
                %s748 = sadd.s32 1, %s744
              $region66: #{_lambda_.3} parent=59 // loop_footer_branch
                %743 = sbr.rel target = $region62
              $region67: #{_lambda_.3} parent=59 // loop_exit
                _
            $region60: #{_lambda_.3} parent=51 // pred_fallthru
              _
          $region52: #{_lambda_.3} parent=47 // pred_fallthru
            _
          %779 = vnop
        $region48: #{_lambda_.3} parent=43 // pred_fallthru
          _
        // Predicated region
        $region83: #{_lambda_.3} parent=43 // pred_check
          %p780 = pneg %p219
        $region84: #{_lambda_.3} parent=43 // pred_check_branch
          %782 = sbr.rel (%p780) target = $region86
        $region85: #{_lambda_.3} parent=43 // pred_region
          %s783 = smul.u32 4, %s24
        $region86: #{_lambda_.3} parent=43 // pred_fallthru
          _
      $region44: #{_lambda_.3} parent=5 // pred_fallthru
        _
      %p784 = scmp.le.s32.totalorder 2, %s14
      // Predicated region
      $region87: #{_lambda_.3} parent=5 // pred_check
        %p785 = pneg %p784
      $region88: #{_lambda_.3} parent=5 // pred_check_branch
        %787 = sbr.rel (%p785) target = $region90
      $region89: #{_lambda_.3} parent=5 // pred_region
        %s788 = ssub.s32 %s14, 2
        // Predicated region
        $region91: #{_lambda_.3} parent=89 // pred_check
          %p789 = pneg %p197
        $region92: #{_lambda_.3} parent=89 // pred_check_branch
          %791 = sbr.rel (%p789) target = $region94
        $region93: #{_lambda_.3} parent=89 // pred_region
          %s792 = sand.u32 %s182, 1
          %s793 = sand.u32 %s182, 1
          %s794 = smul.addr %s793, 32
          %s795 = scalar_lea.vmem [#allocation2], %s794
        $region94: #{_lambda_.3} parent=89 // pred_fallthru
          _
        // Predicated region
        $region95: #{_lambda_.3} parent=89 // pred_check
          %p796 = pneg %p225
        $region96: #{_lambda_.3} parent=89 // pred_check_branch
          %798 = sbr.rel (%p796) target = $region98
        $region97: #{_lambda_.3} parent=89 // pred_region
          %s799 = smul.u32 4, %s26
          %p800 = scmp.lt.s32.totalorder %s25, 1
          %s801 = scalar_select %p800, %s25, 1
          %p802 = scmp.lt.s32.totalorder %s799, 7
          %s803 = scalar_select %p802, %s799, 7
          %s804 = sadd.s32 %s803, 8
          %s805 = smul.addr %s801, 16
          %s806 = sadd.s32 %s804, %s805
          %s807 = smul.addr %s806, 8
          %s808 = scalar_lea.vmem %s7, %s807
        $region98: #{_lambda_.3} parent=89 // pred_fallthru
          _
      $region90: #{_lambda_.3} parent=5 // pred_fallthru
        _
    $region6: #{_lambda_.3} parent=1 // loop_footer
      %s18 = sadd.s32 1, %s14
    $region7: #{_lambda_.3} parent=1 // loop_footer_branch
      %13 = sbr.rel target = $region3
    $region8: #{_lambda_.3} parent=1 // loop_exit
      _

</llo_original>
